<compile_context>
chip_gen: v7x
topology: tpu7x:2x2x1
jax: 0.10.0
libtpu: 0.0.40
codegen_flags: <defaults>
</compile_context>

<pallas_src>
import functools

import jax
import jax.numpy as jnp
import numpy as np
from jax.experimental import pallas as pl
from jax.experimental.pallas import tpu as pltpu


# ----------------------------------------------------------------------------
# small helpers
# ----------------------------------------------------------------------------
def _round_up(x, n):
    return (x + n - 1) // n * n


def _nbytes(shape, dtype):
    return int(np.prod(shape)) * np.dtype(dtype).itemsize


def _vmem_limit(est_bytes):
    # Explicit scoped-VMEM budget: generous margin over the per-step estimate,
    # floored at 32 MiB and capped at v7x's 64 MiB physical VMEM.
    return int(min(max(2 * est_bytes + (4 << 20), 32 << 20), 64 << 20))


# ----------------------------------------------------------------------------
# Pallas kernel 1: 3x3 stride-1 conv as 9 shifted-row matmuls (in-kernel
# "im2col") + bias (+ fused shortcut matmul) + ReLU (+ row mask).
# ----------------------------------------------------------------------------
def _make_tap_conv_kernel(tap_offsets, out_rows, use_mask, use_sc):
    def kernel(*refs):
        i = 0
        x_ref = refs[i]; i += 1            # (rows_in, Cin)     bf16
        w_ref = refs[i]; i += 1            # (9, Cin, Cout_p)   bf16
        b_ref = refs[i]; i += 1            # (1, Cout_p)        f32
        mask_ref = None
        if use_mask:
            mask_ref = refs[i]; i += 1     # (out_rows, 1)      f32
        if use_sc:
            scp_ref = refs[i]; i += 1      # (out_rows, Csc)    bf16
            scw_ref = refs[i]; i += 1      # (Csc, Cout_p)      bf16
        o_ref = refs[i]                    # (out_rows, Cout_p)

        cout_p = o_ref.shape[-1]
        acc = jnp.zeros((out_rows, cout_p), jnp.float32)
        for t, off in enumerate(tap_offsets):     # static unrolled, 9 MXU calls
            xs = x_ref[pl.ds(off, out_rows), :]
            acc = acc + jnp.dot(xs, w_ref[t],
                                preferred_element_type=jnp.float32)
        if use_sc:                                # fused shortcut branch
            acc = acc + jnp.dot(scp_ref[...], scw_ref[...],
                                preferred_element_type=jnp.float32)
        acc = acc + b_ref[...]
        acc = jnp.maximum(acc, 0.0)
        if use_mask:                              # zero margin / pad rows
            acc = acc * mask_ref[...]
        o_ref[...] = acc.astype(o_ref.dtype)

    return kernel


def tap_conv3x3(x_flat, w_tap, bias, wp, out_rows, out_dtype,
                mask=None, sc_p=None, sc_w=None):
    """One image per grid step; the flattened padded image stays in VMEM and the
    9 conv taps are static sublane-offset slices of it (no im2col in HBM)."""
    n, rows_in, cin = x_flat.shape
    cout_p = w_tap.shape[-1]
    offsets = [kh * wp + kw for kh in range(3) for kw in range(3)]
    use_mask = mask is not None
    use_sc = sc_p is not None

    in_specs = [
        pl.BlockSpec((None, rows_in, cin), lambda n: (n, 0, 0)),
        pl.BlockSpec((9, w_tap.shape[1], cout_p), lambda n: (0, 0, 0)),
        pl.BlockSpec((1, cout_p), lambda n: (0, 0)),
    ]
    args = [x_flat, w_tap, bias]
    est = (2 * _nbytes((rows_in, cin), x_flat.dtype)
           + _nbytes(w_tap.shape, w_tap.dtype)
           + _nbytes(bias.shape, bias.dtype)
           + 2 * _nbytes((out_rows, cout_p), out_dtype)
           + _nbytes((out_rows, cout_p), jnp.float32))      # accumulator temps
    if use_mask:
        in_specs.append(pl.BlockSpec((out_rows, 1), lambda n: (0, 0)))
        args.append(mask)
        est += _nbytes(mask.shape, mask.dtype)
    if use_sc:
        csc = sc_p.shape[-1]
        in_specs.append(pl.BlockSpec((None, out_rows, csc), lambda n: (n, 0, 0)))
        in_specs.append(pl.BlockSpec((csc, cout_p), lambda n: (0, 0)))
        args.extend([sc_p, sc_w])
        est += (2 * _nbytes((out_rows, csc), sc_p.dtype)
                + _nbytes(sc_w.shape, sc_w.dtype))

    kernel = _make_tap_conv_kernel(offsets, out_rows, use_mask, use_sc)
    return pl.pallas_call(
        kernel,
        out_shape=jax.ShapeDtypeStruct((n, out_rows, cout_p), out_dtype),
        grid=(n,),
        in_specs=in_specs,
        out_specs=pl.BlockSpec((None, out_rows, cout_p), lambda n: (n, 0, 0)),
        compiler_params=pltpu.CompilerParams(
            dimension_semantics=("parallel",),
            vmem_limit_bytes=_vmem_limit(est)),
    )(*args)


# ----------------------------------------------------------------------------
# Pallas kernel 2: tiled matmul + bias + ReLU (used for the strided conv1),
# bf16 inputs, f32 VMEM accumulator, K reduction axis.
# ----------------------------------------------------------------------------
def _matmul_bias_relu_kernel(p_ref, w_ref, b_ref, o_ref, acc_ref):
    k = pl.program_id(1)

    @pl.when(k == 0)
    def _init():
        acc_ref[...] = jnp.zeros_like(acc_ref)

    acc_ref[...] += jnp.dot(p_ref[...], w_ref[...],
                            preferred_element_type=jnp.float32)

    @pl.when(k == pl.num_programs(1) - 1)
    def _finish():
        o_ref[...] = jnp.maximum(acc_ref[...] + b_ref[...],
                                 0.0).astype(o_ref.dtype)


def matmul_bias_relu(patches, w_mat, bias, out_dtype, tm=512, tk=512):
    m, k_dim = patches.shape
    cout_p = w_mat.shape[-1]

    tm = min(tm, _round_up(m, 8))
    m_pad = _round_up(m, tm)
    if m_pad != m:
        patches = jnp.pad(patches, ((0, m_pad - m), (0, 0)))

    if k_dim <= 1024:                 # weight comfortably resident: one K block
        tk = k_dim
        k_pad = k_dim
    else:                             # K reduction grid axis
        k_pad = _round_up(k_dim, tk)
        if k_pad != k_dim:
            patches = jnp.pad(patches, ((0, 0), (0, k_pad - k_dim)))
            w_mat = jnp.pad(w_mat, ((0, k_pad - k_dim), (0, 0)))

    grid = (m_pad // tm, k_pad // tk)
    est = (2 * _nbytes((tm, tk), patches.dtype)
           + 2 * _nbytes((tk, cout_p), w_mat.dtype)
           + 2 * _nbytes((tm, cout_p), out_dtype)
           + _nbytes((tm, cout_p), jnp.float32)
           + _nbytes(bias.shape, bias.dtype))
    out = pl.pallas_call(
        _matmul_bias_relu_kernel,
        out_shape=jax.ShapeDtypeStruct((m_pad, cout_p), out_dtype),
        grid=grid,
        in_specs=[
            pl.BlockSpec((tm, tk), lambda i, k: (i, k)),
            pl.BlockSpec((tk, cout_p), lambda i, k: (k, 0)),
            pl.BlockSpec((1, cout_p), lambda i, k: (0, 0)),
        ],
        out_specs=pl.BlockSpec((tm, cout_p), lambda i, k: (i, 0)),
        scratch_shapes=[pltpu.VMEM((tm, cout_p), jnp.float32)],
        compiler_params=pltpu.CompilerParams(
            dimension_semantics=("parallel", "arbitrary"),
            vmem_limit_bytes=_vmem_limit(est)),
    )(patches, w_mat, bias)
    return out[:m]


# ----------------------------------------------------------------------------
# Glue: BN folding, weight reshaping, padding/masks, im2col for strided conv1
# ----------------------------------------------------------------------------
def _pad_last(x, target):
    pad = target - x.shape[-1]
    if pad <= 0:
        return x
    cfg = [(0, 0)] * (x.ndim - 1) + [(0, pad)]
    return jnp.pad(x, cfg)


def _fold_bn(bn, eps=1e-5):
    scale = bn["gamma"] / jnp.sqrt(bn["var"] + eps)
    bias = bn["beta"] - bn["mean"] * scale
    return scale, bias


def _tap_weight(w_oihw, cout_p, cin_p=None):
    """(Cout, Cin, 3, 3) -> (9, Cin[_p], Cout_p) bf16, tap order (kh, kw)."""
    cout, cin, kh, kw = w_oihw.shape
    w = jnp.transpose(w_oihw, (2, 3, 1, 0)).reshape(kh * kw, cin, cout)
    w = _pad_last(w, cout_p)
    if cin_p is not None and cin_p > cin:
        w = jnp.pad(w, ((0, 0), (0, cin_p - cin), (0, 0)))
    return w.astype(jnp.bfloat16)


def _weight_to_mat(w_oihw, cout_p):
    """(Cout, Cin, KH, KW) -> (KH*KW*Cin, Cout_p) bf16 (im2col column order)."""
    cout = w_oihw.shape[0]
    w = jnp.transpose(w_oihw, (2, 3, 1, 0)).reshape(-1, cout)
    return _pad_last(w, cout_p).astype(jnp.bfloat16)


def _im2col(x_nhwc, ksize, stride, pad):
    n, h, w, c = x_nhwc.shape
    xp = jnp.pad(x_nhwc, ((0, 0), (pad, pad), (pad, pad), (0, 0)))
    ho = (h + 2 * pad - ksize) // stride + 1
    wo = (w + 2 * pad - ksize) // stride + 1
    cols = []
    for kh in range(ksize):
        for kw in range(ksize):
            cols.append(xp[:, kh:kh + stride * ho:stride,
                           kw:kw + stride * wo:stride, :])
    patches = jnp.concatenate(cols, axis=-1)
    return patches.reshape(n * ho * wo, ksize * ksize * c), (ho, wo)


def _valid_row_mask(ho, wo):
    """(L, 1) f32 mask that zeroes the margin / zero-pad rows of an L-layout."""
    hp, wp = ho + 2, wo + 2
    m = wp + 1
    plane = np.zeros((hp, wp), np.float32)
    plane[1:ho + 1, 1:wo + 1] = 1.0
    mask = np.concatenate([np.zeros(m, np.float32),
                           plane.reshape(-1),
                           np.zeros(m, np.float32)])
    return jnp.asarray(mask).reshape(-1, 1)


# ----------------------------------------------------------------------------
# BasicBlock forward
# ----------------------------------------------------------------------------
def basic_block_forward(x_nchw, params, stride):
    x = jnp.transpose(x_nchw, (0, 2, 3, 1))          # NHWC, f32
    n, h, w, cin = x.shape
    cout = params["conv1_w"].shape[0]
    cout_p = _round_up(max(cout, 128), 128)          # lane-dense channel count

    ho = (h + 2 - 3) // stride + 1
    wo = (w + 2 - 3) // stride + 1
    hp, wp = ho + 2, wo + 2                          # conv2's padded plane
    margin = wp + 1
    l_rows = hp * wp + 2 * margin                    # "L-layout" row count

    x_bf = x.astype(jnp.bfloat16)

    # ---- fold BN (inference) into weights / biases --------------------------
    s1, b1 = _fold_bn(params["bn1"])
    s2, b2 = _fold_bn(params["bn2"])
    w1 = params["conv1_w"] * s1[:, None, None, None]
    w2 = params["conv2_w"] * s2[:, None, None, None]
    bias1 = _pad_last(b1.reshape(1, -1), cout_p).astype(jnp.float32)

    has_proj = (stride != 1) or (cin != cout)
    if has_proj:
        ss, bs = _fold_bn(params["sc_bn"])
        sc_w = jnp.transpose(params["sc_w"][:, :, 0, 0] * ss[:, None])  # (Cin, Cout)
        bias2_vec = b2 + ss * params["sc_b"] + bs    # fold conv-bias + BN bias
    else:
        sc_w = jnp.eye(cin, dtype=jnp.float32)       # identity shortcut as matmul
        bias2_vec = b2
    sc_w_mat = _pad_last(sc_w, cout_p).astype(jnp.bfloat16)
    bias2 = _pad_last(bias2_vec.reshape(1, -1), cout_p).astype(jnp.float32)

    # ---- conv1 + bn1 + relu --------------------------------------------------
    if stride == 1:
        # In-kernel 3x3 taps over the flattened padded image (no im2col).
        xp = jnp.pad(x_bf, ((0, 0), (1, 1), (1, 1), (0, 0)))
        x_ext = jnp.pad(xp.reshape(n, hp * wp, cin),
                        ((0, 0), (2 * margin, 2 * margin), (0, 0)))
        y1 = tap_conv3x3(
            x_ext, _tap_weight(w1, cout_p), bias1, wp,
            out_rows=l_rows, out_dtype=jnp.bfloat16,
            mask=_valid_row_mask(ho, wo))
        # y1 is already conv2's padded, flattened input (zeros in all pad rows).
    else:
        # TODO(synk): strided 3x3 conv still uses glue im2col (+ one re-pad pass
        # over out1); the in-kernel tap path covers the stride==1 convs.
        p1, _ = _im2col(x_bf, 3, stride, 1)
        y1_rows = matmul_bias_relu(p1, _weight_to_mat(w1, cout_p), bias1,
                                   out_dtype=jnp.bfloat16)
        y1_sp = y1_rows.reshape(n, ho, wo, cout_p)
        y1 = jnp.pad(y1_sp, ((0, 0), (1, 1), (1, 1), (0, 0)))
        y1 = jnp.pad(y1.reshape(n, hp * wp, cout_p),
                     ((0, 0), (margin, margin), (0, 0)))

    # ---- shortcut operand (one row per padded output pixel) ------------------
    x_sub = x_bf[:, ::stride, ::stride, :]
    sc_p = jnp.pad(x_sub, ((0, 0), (1, 1), (1, 1), (0, 0))).reshape(
        n, hp * wp, cin)

    # ---- conv2 + bn2 + fused shortcut + relu ---------------------------------
    out2 = tap_conv3x3(
        y1, _tap_weight(w2, cout_p, cin_p=cout_p), bias2, wp,
        out_rows=hp * wp, out_dtype=jnp.float32,
        sc_p=sc_p, sc_w=sc_w_mat)

    out = out2.reshape(n, hp, wp, cout_p)[:, 1:ho + 1, 1:wo + 1, :cout]
    return jnp.transpose(out, (0, 3, 1, 2))          # back to NCHW


# ----------------------------------------------------------------------------
# Pure-JAX f32 reference (lax conv) for correctness checking
# ----------------------------------------------------------------------------
def reference_forward(x, params, stride, eps=1e-5):
    def conv(x, w, s, p):
        return jax.lax.conv_general_dilated(
            x, w, (s, s), [(p, p), (p, p)],
            dimension_numbers=("NCHW", "OIHW", "NCHW"))

    def bn(x, b):
        g = b["gamma"][None, :, None, None]
        be = b["beta"][None, :, None, None]
        m = b["mean"][None, :, None, None]
        v = b["var"][None, :, None, None]
        return (x - m) / jnp.sqrt(v + eps) * g + be

    out = jax.nn.relu(bn(conv(x, params["conv1_w"], stride, 1), params["bn1"]))
    out = bn(conv(out, params["conv2_w"], 1, 1), params["bn2"])
    if "sc_w" in params:
        sc = conv(x, params["sc_w"], stride, 0) + params["sc_b"][None, :, None, None]
        sc = bn(sc, params["sc_bn"])
    else:
        sc = x
    return jax.nn.relu(out + sc)


# ----------------------------------------------------------------------------
# Deterministic parameter init + demo
# ----------------------------------------------------------------------------
def init_params(key, in_channels, out_channels, stride):
    ks = jax.random.split(key, 12)

    def bn_params(k):
        k0, k1, k2, k3 = jax.random.split(k, 4)
        return {
            "gamma": 1.0 + 0.1 * jax.random.normal(k0, (out_channels,), jnp.float32),
            "beta": 0.1 * jax.random.normal(k1, (out_channels,), jnp.float32),
            "mean": 0.1 * jax.random.normal(k2, (out_channels,), jnp.float32),
            "var": jnp.abs(1.0 + 0.1 * jax.random.normal(k3, (out_channels,), jnp.float32)),
        }

    params = {
        "conv1_w": 0.1 * jax.random.normal(ks[0], (out_channels, in_channels, 3, 3), jnp.float32),
        "bn1": bn_params(ks[1]),
        "conv2_w": 0.1 * jax.random.normal(ks[2], (out_channels, out_channels, 3, 3), jnp.float32),
        "bn2": bn_params(ks[3]),
    }
    if stride != 1 or in_channels != out_channels:
        params["sc_w"] = 0.1 * jax.random.normal(ks[4], (out_channels, in_channels, 1, 1), jnp.float32)
        params["sc_b"] = 0.1 * jax.random.normal(ks[5], (out_channels,), jnp.float32)
        params["sc_bn"] = bn_params(ks[6])
    return params


if __name__ == "__main__":
    root = jax.random.PRNGKey(0)
    configs = [
        # (N, Cin, H, W, Cout, stride)
        (2, 4, 16, 16, 8, 2),   # projection shortcut; strided conv1 (matmul path)
        (2, 8, 16, 16, 8, 1),   # identity shortcut; fully in-kernel tap convs
    ]
    for (n, cin, h, w, cout, stride) in configs:
        root, kx, kp = jax.random.split(root, 3)
        x = jax.random.normal(kx, (n, cin, h, w), jnp.float32)
        params = init_params(kp, cin, cout, stride)

        fwd = jax.jit(functools.partial(basic_block_forward, stride=stride))
        out = jax.block_until_ready(fwd(x, params))

        ref = reference_forward(x, params, stride)
        ho = (h + 2 - 3) // stride + 1
        wo = (w + 2 - 3) // stride + 1
        assert out.shape == ref.shape == (n, cout, ho, wo)
        # bf16 MXU inputs vs f32 reference -> looser tolerance than pure f32.
        np.testing.assert_allclose(np.asarray(out), np.asarray(ref),
                                   rtol=5e-2, atol=5e-2)
    print("KERNEL_OK")
</pallas_src>

<mosaic_0001>
module attributes {stable_mosaic.version = 11 : i64} {
  func.func @_matmul_bias_relu_kernel(%arg0: i32, %arg1: i32, %arg2: memref<128x36xbf16, #tpu.memory_space<vmem>>, %arg3: memref<36x128xbf16, #tpu.memory_space<vmem>>, %arg4: memref<1x128xf32, #tpu.memory_space<vmem>>, %arg5: memref<128x128xbf16, #tpu.memory_space<vmem>>, %arg6: memref<128x128xf32, #tpu.memory_space<vmem>>) attributes {dimension_semantics = [#tpu.dimension_semantics<parallel>, #tpu.dimension_semantics<arbitrary>], iteration_bounds = array<i64: 1, 1>, scalar_prefetch = 0 : i64, scratch_operands = 1 : i64, tpu.core_type = #tpu.core_type<tc>, window_params = [{transform_indices = @transform_0, window_bounds = array<i64: 128, 36>}, {transform_indices = @transform_1, window_bounds = array<i64: 36, 128>}, {pipeline_mode = #tpu.pipeline_mode<synchronous>, transform_indices = @transform_2, window_bounds = array<i64: 1, 128>}, {transform_indices = @transform_3, window_bounds = array<i64: 128, 128>}]} {
    %c0_i32 = arith.constant 0 : i32
    %0 = arith.cmpi eq, %arg1, %c0_i32 : i32
    %1 = arith.extui %0 : i1 to i32
    %c0_i32_0 = arith.constant 0 : i32
    %2 = arith.cmpi ne, %1, %c0_i32_0 : i32
    scf.if %2 {
      %cst_10 = arith.constant 0.000000e+00 : f32
      %12 = vector.broadcast %cst_10 : f32 to vector<128x128xf32>
      %c0_11 = arith.constant 0 : index
      %c0_12 = arith.constant 0 : index
      %13 = vector.load %arg6[%c0_11, %c0_12] : memref<128x128xf32, #tpu.memory_space<vmem>>, vector<128x128xf32>
      tpu.vector_store %arg6[%c0_11, %c0_12], %12 {strides = array<i32>} : memref<128x128xf32, #tpu.memory_space<vmem>>, vector<128x128xf32>,
    } else {
    }
    %c0 = arith.constant 0 : index
    %c0_1 = arith.constant 0 : index
    %3 = vector.load %arg6[%c0, %c0_1] : memref<128x128xf32, #tpu.memory_space<vmem>>, vector<128x128xf32>
    %c0_2 = arith.constant 0 : index
    %c0_3 = arith.constant 0 : index
    %4 = vector.load %arg2[%c0_2, %c0_3] : memref<128x36xbf16, #tpu.memory_space<vmem>>, vector<128x36xbf16>
    %c0_4 = arith.constant 0 : index
    %c0_5 = arith.constant 0 : index
    %5 = vector.load %arg3[%c0_4, %c0_5] : memref<36x128xbf16, #tpu.memory_space<vmem>>, vector<36x128xbf16>
    %cst = arith.constant dense<0.000000e+00> : vector<128x128xf32>
    %6 = tpu.matmul %4, %5, %cst {dimension_numbers = #tpu.dot_dimension_numbers<[1], [0], [0], [1], [0, 0, 1, 1], [], []>} : vector<128x36xbf16>, vector<36x128xbf16>, vector<128x128xf32> -> vector<128x128xf32>
    %7 = arith.addf %3, %6 : vector<128x128xf32>
    %c0_6 = arith.constant 0 : index
    %c0_7 = arith.constant 0 : index
    %8 = vector.load %arg6[%c0_6, %c0_7] : memref<128x128xf32, #tpu.memory_space<vmem>>, vector<128x128xf32>
    tpu.vector_store %arg6[%c0_6, %c0_7], %7 {strides = array<i32>} : memref<128x128xf32, #tpu.memory_space<vmem>>, vector<128x128xf32>,
    %c0_i32_8 = arith.constant 0 : i32
    %9 = arith.cmpi eq, %arg1, %c0_i32_8 : i32
    %10 = arith.extui %9 : i1 to i32
    %c0_i32_9 = arith.constant 0 : i32
    %11 = arith.cmpi ne, %10, %c0_i32_9 : i32
    scf.if %11 {
      %c0_10 = arith.constant 0 : index
      %c0_11 = arith.constant 0 : index
      %12 = vector.load %arg6[%c0_10, %c0_11] : memref<128x128xf32, #tpu.memory_space<vmem>>, vector<128x128xf32>
      %c0_12 = arith.constant 0 : index
      %c0_13 = arith.constant 0 : index
      %13 = vector.load %arg4[%c0_12, %c0_13] : memref<1x128xf32, #tpu.memory_space<vmem>>, vector<1x128xf32>
      %14 = vector.broadcast %13 : vector<1x128xf32> to vector<128x128xf32>
      %15 = arith.addf %12, %14 : vector<128x128xf32>
      %cst_14 = arith.constant 0.000000e+00 : f32
      %16 = vector.broadcast %cst_14 : f32 to vector<128x128xf32>
      %17 = arith.maximumf %15, %16 : vector<128x128xf32>
      %18 = arith.truncf %17 : vector<128x128xf32> to vector<128x128xbf16>
      %c0_15 = arith.constant 0 : index
      %c0_16 = arith.constant 0 : index
      %19 = vector.load %arg5[%c0_15, %c0_16] : memref<128x128xbf16, #tpu.memory_space<vmem>>, vector<128x128xbf16>
      tpu.vector_store %arg5[%c0_15, %c0_16], %18 {strides = array<i32>} : memref<128x128xbf16, #tpu.memory_space<vmem>>, vector<128x128xbf16>,
    } else {
    }
    return
  }
  func.func @transform_0(%arg0: i32, %arg1: i32) -> (i32, i32) {
    %c0_i32 = arith.constant 0 : i32
    return %arg0, %arg1 : i32, i32
  }
  func.func @transform_1(%arg0: i32, %arg1: i32) -> (i32, i32) {
    %c0_i32 = arith.constant 0 : i32
    %c0_i32_0 = arith.constant 0 : i32
    return %arg1, %c0_i32 : i32, i32
  }
  func.func @transform_2(%arg0: i32, %arg1: i32) -> (i32, i32) {
    %c0_i32 = arith.constant 0 : i32
    %c0_i32_0 = arith.constant 0 : i32
    %c0_i32_1 = arith.constant 0 : i32
    return %c0_i32, %c0_i32_0 : i32, i32
  }
  func.func @transform_3(%arg0: i32, %arg1: i32) -> (i32, i32) {
    %c0_i32 = arith.constant 0 : i32
    %c0_i32_0 = arith.constant 0 : i32
    return %arg0, %c0_i32 : i32, i32
  }
}

module attributes {stable_mosaic.version = 11 : i64} {
  func.func @kernel(%arg0: i32, %arg1: memref<1x122x128xbf16, #tpu.memory_space<vmem>>, %arg2: memref<9x128x128xbf16, #tpu.memory_space<vmem>>, %arg3: memref<1x128xf32, #tpu.memory_space<vmem>>, %arg4: memref<1x100x4xbf16, #tpu.memory_space<vmem>>, %arg5: memref<4x128xbf16, #tpu.memory_space<vmem>>, %arg6: memref<1x100x128xf32, #tpu.memory_space<vmem>>) attributes {dimension_semantics = [#tpu.dimension_semantics<parallel>], iteration_bounds = array<i64: 2>, scalar_prefetch = 0 : i64, scratch_operands = 0 : i64, tpu.core_type = #tpu.core_type<tc>, window_params = [{transform_indices = @transform_0, window_bounds = array<i64: 1, 122, 128>}, {pipeline_mode = #tpu.pipeline_mode<synchronous>, transform_indices = @transform_1, window_bounds = array<i64: 9, 128, 128>}, {pipeline_mode = #tpu.pipeline_mode<synchronous>, transform_indices = @transform_2, window_bounds = array<i64: 1, 128>}, {transform_indices = @transform_3, window_bounds = array<i64: 1, 100, 4>}, {pipeline_mode = #tpu.pipeline_mode<synchronous>, transform_indices = @transform_4, window_bounds = array<i64: 4, 128>}, {transform_indices = @transform_5, window_bounds = array<i64: 1, 100, 128>}]} {
    %cst = arith.constant 0.000000e+00 : f32
    %0 = vector.broadcast %cst : f32 to vector<100x128xf32>
    %c0 = arith.constant 0 : index
    %c0_0 = arith.constant 0 : index
    %c0_1 = arith.constant 0 : index
    %1 = vector.load %arg1[%c0, %c0_0, %c0_1] : memref<1x122x128xbf16, #tpu.memory_space<vmem>>, vector<1x100x128xbf16>
    %2 = vector.shape_cast %1 : vector<1x100x128xbf16> to vector<100x128xbf16>
    %c0_2 = arith.constant 0 : index
    %c0_3 = arith.constant 0 : index
    %c0_4 = arith.constant 0 : index
    %3 = vector.load %arg2[%c0_2, %c0_3, %c0_4] : memref<9x128x128xbf16, #tpu.memory_space<vmem>>, vector<1x128x128xbf16>
    %4 = vector.shape_cast %3 : vector<1x128x128xbf16> to vector<128x128xbf16>
    %cst_5 = arith.constant dense<0.000000e+00> : vector<100x128xf32>
    %5 = tpu.matmul %2, %4, %cst_5 {dimension_numbers = #tpu.dot_dimension_numbers<[1], [0], [0], [1], [0, 0, 1, 1], [], []>} : vector<100x128xbf16>, vector<128x128xbf16>, vector<100x128xf32> -> vector<100x128xf32>
    %6 = arith.addf %0, %5 : vector<100x128xf32>
    %c0_6 = arith.constant 0 : index
    %c1 = arith.constant 1 : index
    %c0_7 = arith.constant 0 : index
    %7 = vector.load %arg1[%c0_6, %c1, %c0_7] : memref<1x122x128xbf16, #tpu.memory_space<vmem>>, vector<1x100x128xbf16>
    %8 = vector.shape_cast %7 : vector<1x100x128xbf16> to vector<100x128xbf16>
    %c1_8 = arith.constant 1 : index
    %c0_9 = arith.constant 0 : index
    %c0_10 = arith.constant 0 : index
    %9 = vector.load %arg2[%c1_8, %c0_9, %c0_10] : memref<9x128x128xbf16, #tpu.memory_space<vmem>>, vector<1x128x128xbf16>
    %10 = vector.shape_cast %9 : vector<1x128x128xbf16> to vector<128x128xbf16>
    %cst_11 = arith.constant dense<0.000000e+00> : vector<100x128xf32>
    %11 = tpu.matmul %8, %10, %cst_11 {dimension_numbers = #tpu.dot_dimension_numbers<[1], [0], [0], [1], [0, 0, 1, 1], [], []>} : vector<100x128xbf16>, vector<128x128xbf16>, vector<100x128xf32> -> vector<100x128xf32>
    %12 = arith.addf %6, %11 : vector<100x128xf32>
    %c0_12 = arith.constant 0 : index
    %c2 = arith.constant 2 : index
    %c0_13 = arith.constant 0 : index
    %13 = vector.load %arg1[%c0_12, %c2, %c0_13] : memref<1x122x128xbf16, #tpu.memory_space<vmem>>, vector<1x100x128xbf16>
    %14 = vector.shape_cast %13 : vector<1x100x128xbf16> to vector<100x128xbf16>
    %c2_14 = arith.constant 2 : index
    %c0_15 = arith.constant 0 : index
    %c0_16 = arith.constant 0 : index
    %15 = vector.load %arg2[%c2_14, %c0_15, %c0_16] : memref<9x128x128xbf16, #tpu.memory_space<vmem>>, vector<1x128x128xbf16>
    %16 = vector.shape_cast %15 : vector<1x128x128xbf16> to vector<128x128xbf16>
    %cst_17 = arith.constant dense<0.000000e+00> : vector<100x128xf32>
    %17 = tpu.matmul %14, %16, %cst_17 {dimension_numbers = #tpu.dot_dimension_numbers<[1], [0], [0], [1], [0, 0, 1, 1], [], []>} : vector<100x128xbf16>, vector<128x128xbf16>, vector<100x128xf32> -> vector<100x128xf32>
    %18 = arith.addf %12, %17 : vector<100x128xf32>
    %c0_18 = arith.constant 0 : index
    %c10 = arith.constant 10 : index
    %c0_19 = arith.constant 0 : index
    %19 = vector.load %arg1[%c0_18, %c10, %c0_19] : memref<1x122x128xbf16, #tpu.memory_space<vmem>>, vector<1x100x128xbf16>
    %20 = vector.shape_cast %19 : vector<1x100x128xbf16> to vector<100x128xbf16>
    %c3 = arith.constant 3 : index
    %c0_20 = arith.constant 0 : index
    %c0_21 = arith.constant 0 : index
    %21 = vector.load %arg2[%c3, %c0_20, %c0_21] : memref<9x128x128xbf16, #tpu.memory_space<vmem>>, vector<1x128x128xbf16>
    %22 = vector.shape_cast %21 : vector<1x128x128xbf16> to vector<128x128xbf16>
    %cst_22 = arith.constant dense<0.000000e+00> : vector<100x128xf32>
    %23 = tpu.matmul %20, %22, %cst_22 {dimension_numbers = #tpu.dot_dimension_numbers<[1], [0], [0], [1], [0, 0, 1, 1], [], []>} : vector<100x128xbf16>, vector<128x128xbf16>, vector<100x128xf32> -> vector<100x128xf32>
    %24 = arith.addf %18, %23 : vector<100x128xf32>
    %c0_23 = arith.constant 0 : index
    %c11 = arith.constant 11 : index
    %c0_24 = arith.constant 0 : index
    %25 = vector.load %arg1[%c0_23, %c11, %c0_24] : memref<1x122x128xbf16, #tpu.memory_space<vmem>>, vector<1x100x128xbf16>
    %26 = vector.shape_cast %25 : vector<1x100x128xbf16> to vector<100x128xbf16>
    %c4 = arith.constant 4 : index
    %c0_25 = arith.constant 0 : index
    %c0_26 = arith.constant 0 : index
    %27 = vector.load %arg2[%c4, %c0_25, %c0_26] : memref<9x128x128xbf16, #tpu.memory_space<vmem>>, vector<1x128x128xbf16>
    %28 = vector.shape_cast %27 : vector<1x128x128xbf16> to vector<128x128xbf16>
    %cst_27 = arith.constant dense<0.000000e+00> : vector<100x128xf32>
    %29 = tpu.matmul %26, %28, %cst_27 {dimension_numbers = #tpu.dot_dimension_numbers<[1], [0], [0], [1], [0, 0, 1, 1], [], []>} : vector<100x128xbf16>, vector<128x128xbf16>, vector<100x128xf32> -> vector<100x128xf32>
    %30 = arith.addf %24, %29 : vector<100x128xf32>
    %c0_28 = arith.constant 0 : index
    %c12 = arith.constant 12 : index
    %c0_29 = arith.constant 0 : index
    %31 = vector.load %arg1[%c0_28, %c12, %c0_29] : memref<1x122x128xbf16, #tpu.memory_space<vmem>>, vector<1x100x128xbf16>
    %32 = vector.shape_cast %31 : vector<1x100x128xbf16> to vector<100x128xbf16>
    %c5 = arith.constant 5 : index
    %c0_30 = arith.constant 0 : index
    %c0_31 = arith.constant 0 : index
    %33 = vector.load %arg2[%c5, %c0_30, %c0_31] : memref<9x128x128xbf16, #tpu.memory_space<vmem>>, vector<1x128x128xbf16>
    %34 = vector.shape_cast %33 : vector<1x128x128xbf16> to vector<128x128xbf16>
    %cst_32 = arith.constant dense<0.000000e+00> : vector<100x128xf32>
    %35 = tpu.matmul %32, %34, %cst_32 {dimension_numbers = #tpu.dot_dimension_numbers<[1], [0], [0], [1], [0, 0, 1, 1], [], []>} : vector<100x128xbf16>, vector<128x128xbf16>, vector<100x128xf32> -> vector<100x128xf32>
    %36 = arith.addf %30, %35 : vector<100x128xf32>
    %c0_33 = arith.constant 0 : index
    %c20 = arith.constant 20 : index
    %c0_34 = arith.constant 0 : index
    %37 = vector.load %arg1[%c0_33, %c20, %c0_34] : memref<1x122x128xbf16, #tpu.memory_space<vmem>>, vector<1x100x128xbf16>
    %38 = vector.shape_cast %37 : vector<1x100x128xbf16> to vector<100x128xbf16>
    %c6 = arith.constant 6 : index
    %c0_35 = arith.constant 0 : index
    %c0_36 = arith.constant 0 : index
    %39 = vector.load %arg2[%c6, %c0_35, %c0_36] : memref<9x128x128xbf16, #tpu.memory_space<vmem>>, vector<1x128x128xbf16>
    %40 = vector.shape_cast %39 : vector<1x128x128xbf16> to vector<128x128xbf16>
    %cst_37 = arith.constant dense<0.000000e+00> : vector<100x128xf32>
    %41 = tpu.matmul %38, %40, %cst_37 {dimension_numbers = #tpu.dot_dimension_numbers<[1], [0], [0], [1], [0, 0, 1, 1], [], []>} : vector<100x128xbf16>, vector<128x128xbf16>, vector<100x128xf32> -> vector<100x128xf32>
    %42 = arith.addf %36, %41 : vector<100x128xf32>
    %c0_38 = arith.constant 0 : index
    %c21 = arith.constant 21 : index
    %c0_39 = arith.constant 0 : index
    %43 = vector.load %arg1[%c0_38, %c21, %c0_39] : memref<1x122x128xbf16, #tpu.memory_space<vmem>>, vector<1x100x128xbf16>
    %44 = vector.shape_cast %43 : vector<1x100x128xbf16> to vector<100x128xbf16>
    %c7 = arith.constant 7 : index
    %c0_40 = arith.constant 0 : index
    %c0_41 = arith.constant 0 : index
    %45 = vector.load %arg2[%c7, %c0_40, %c0_41] : memref<9x128x128xbf16, #tpu.memory_space<vmem>>, vector<1x128x128xbf16>
    %46 = vector.shape_cast %45 : vector<1x128x128xbf16> to vector<128x128xbf16>
    %cst_42 = arith.constant dense<0.000000e+00> : vector<100x128xf32>
    %47 = tpu.matmul %44, %46, %cst_42 {dimension_numbers = #tpu.dot_dimension_numbers<[1], [0], [0], [1], [0, 0, 1, 1], [], []>} : vector<100x128xbf16>, vector<128x128xbf16>, vector<100x128xf32> -> vector<100x128xf32>
    %48 = arith.addf %42, %47 : vector<100x128xf32>
    %c0_43 = arith.constant 0 : index
    %c22 = arith.constant 22 : index
    %c0_44 = arith.constant 0 : index
    %49 = vector.load %arg1[%c0_43, %c22, %c0_44] : memref<1x122x128xbf16, #tpu.memory_space<vmem>>, vector<1x100x128xbf16>
    %50 = vector.shape_cast %49 : vector<1x100x128xbf16> to vector<100x128xbf16>
    %c8 = arith.constant 8 : index
    %c0_45 = arith.constant 0 : index
    %c0_46 = arith.constant 0 : index
    %51 = vector.load %arg2[%c8, %c0_45, %c0_46] : memref<9x128x128xbf16, #tpu.memory_space<vmem>>, vector<1x128x128xbf16>
    %52 = vector.shape_cast %51 : vector<1x128x128xbf16> to vector<128x128xbf16>
    %cst_47 = arith.constant dense<0.000000e+00> : vector<100x128xf32>
    %53 = tpu.matmul %50, %52, %cst_47 {dimension_numbers = #tpu.dot_dimension_numbers<[1], [0], [0], [1], [0, 0, 1, 1], [], []>} : vector<100x128xbf16>, vector<128x128xbf16>, vector<100x128xf32> -> vector<100x128xf32>
    %54 = arith.addf %48, %53 : vector<100x128xf32>
    %c0_48 = arith.constant 0 : index
    %c0_49 = arith.constant 0 : index
    %c0_50 = arith.constant 0 : index
    %55 = vector.load %arg4[%c0_48, %c0_49, %c0_50] : memref<1x100x4xbf16, #tpu.memory_space<vmem>>, vector<1x100x4xbf16>
    %56 = vector.shape_cast %55 : vector<1x100x4xbf16> to vector<100x4xbf16>
    %c0_51 = arith.constant 0 : index
    %c0_52 = arith.constant 0 : index
    %57 = vector.load %arg5[%c0_51, %c0_52] : memref<4x128xbf16, #tpu.memory_space<vmem>>, vector<4x128xbf16>
    %cst_53 = arith.constant dense<0.000000e+00> : vector<100x128xf32>
    %58 = tpu.matmul %56, %57, %cst_53 {dimension_numbers = #tpu.dot_dimension_numbers<[1], [0], [0], [1], [0, 0, 1, 1], [], []>} : vector<100x4xbf16>, vector<4x128xbf16>, vector<100x128xf32> -> vector<100x128xf32>
    %59 = arith.addf %54, %58 : vector<100x128xf32>
    %c0_54 = arith.constant 0 : index
    %c0_55 = arith.constant 0 : index
    %60 = vector.load %arg3[%c0_54, %c0_55] : memref<1x128xf32, #tpu.memory_space<vmem>>, vector<1x128xf32>
    %61 = vector.broadcast %60 : vector<1x128xf32> to vector<100x128xf32>
    %62 = arith.addf %59, %61 : vector<100x128xf32>
    %cst_56 = arith.constant 0.000000e+00 : f32
    %63 = vector.broadcast %cst_56 : f32 to vector<100x128xf32>
    %64 = arith.maximumf %62, %63 : vector<100x128xf32>
    %c0_57 = arith.constant 0 : index
    %c0_58 = arith.constant 0 : index
    %c0_59 = arith.constant 0 : index
    %65 = vector.load %arg6[%c0_57, %c0_58, %c0_59] : memref<1x100x128xf32, #tpu.memory_space<vmem>>, vector<1x100x128xf32>
    %66 = vector.shape_cast %65 : vector<1x100x128xf32> to vector<100x128xf32>
    %67 = vector.shape_cast %64 : vector<100x128xf32> to vector<1x100x128xf32>
    tpu.vector_store %arg6[%c0_57, %c0_58, %c0_59], %67 {strides = array<i32>} : memref<1x100x128xf32, #tpu.memory_space<vmem>>, vector<1x100x128xf32>,
    return
  }
  func.func @transform_0(%arg0: i32) -> (i32, i32, i32) {
    %c0_i32 = arith.constant 0 : i32
    %c0_i32_0 = arith.constant 0 : i32
    %c0_i32_1 = arith.constant 0 : i32
    return %arg0, %c0_i32, %c0_i32_0 : i32, i32, i32
  }
  func.func @transform_1(%arg0: i32) -> (i32, i32, i32) {
    %c0_i32 = arith.constant 0 : i32
    %c0_i32_0 = arith.constant 0 : i32
    %c0_i32_1 = arith.constant 0 : i32
    %c0_i32_2 = arith.constant 0 : i32
    return %c0_i32, %c0_i32_0, %c0_i32_1 : i32, i32, i32
  }
  func.func @transform_2(%arg0: i32) -> (i32, i32) {
    %c0_i32 = arith.constant 0 : i32
    %c0_i32_0 = arith.constant 0 : i32
    %c0_i32_1 = arith.constant 0 : i32
    return %c0_i32, %c0_i32_0 : i32, i32
  }
  func.func @transform_3(%arg0: i32) -> (i32, i32, i32) {
    %c0_i32 = arith.constant 0 : i32
    %c0_i32_0 = arith.constant 0 : i32
    %c0_i32_1 = arith.constant 0 : i32
    return %arg0, %c0_i32, %c0_i32_0 : i32, i32, i32
  }
  func.func @transform_4(%arg0: i32) -> (i32, i32) {
    %c0_i32 = arith.constant 0 : i32
    %c0_i32_0 = arith.constant 0 : i32
    %c0_i32_1 = arith.constant 0 : i32
    return %c0_i32, %c0_i32_0 : i32, i32
  }
  func.func @transform_5(%arg0: i32) -> (i32, i32, i32) {
    %c0_i32 = arith.constant 0 : i32
    %c0_i32_0 = arith.constant 0 : i32
    %c0_i32_1 = arith.constant 0 : i32
    return %arg0, %c0_i32, %c0_i32_0 : i32, i32, i32
  }
}

</mosaic_0001>

<llo_original>
// kernel: basic_block_forward.2
$region0: #{basic_block_forward.2}
  #allocation0 [shape = 'u32[]', space=smem, size = 0x4, offset = 0x4, fixed_abs, tag = 'smem constant byte address 0x4 - core index']
  #allocation1 [shape = 'u32[144,128]{1,0:T(1,128)}', space=vmem, size = 0x12000, scoped, tag = 'internal scratch']
  #allocation2 [shape = 'f32[128,128]{1,0:T(8,128)}', space=vmem, size = 0x10000, scoped, tag = 'scratch operand']
  %s0 = inlined_call_operand.vmem [shape: bf16[128,36], index: 0, kind: input, shape index: {}]
  %s1 = inlined_call_operand.vmem [shape: bf16[36,128], index: 1, kind: input, shape index: {}]
  %s2 = inlined_call_operand.vmem [shape: f32[1,128], index: 2, kind: input, shape index: {}]
  %s3 = inlined_call_operand.vmem [shape: bf16[128,128], index: 3, kind: output, shape index: {}]
  %s4 = sld [smem:[#allocation0]]
  $region30: #{basic_block_forward.2} parent=0
    _
  %s6 = ssub.s32 1, %s4
  %s7 = scalar_select 0, %s6, %s4
  // Predicated region
  $region2: #{basic_block_forward.2} parent=0 // pred_check
    _
  $region3: #{basic_block_forward.2} parent=0 // pred_check_branch
    %9 = sbr.rel (0) target = $region5
  $region4: #{basic_block_forward.2} parent=0 // pred_region
    _
  $region5: #{basic_block_forward.2} parent=0 // pred_fallthru
    _
  // Predicated region
  $region6: #{basic_block_forward.2} parent=0 // pred_check
    _
  $region7: #{basic_block_forward.2} parent=0 // pred_check_branch
    %11 = sbr.rel (0) target = $region9
  $region8: #{basic_block_forward.2} parent=0 // pred_region
    _
  $region9: #{basic_block_forward.2} parent=0 // pred_fallthru
    _
  // Predicated region
  $region10: #{basic_block_forward.2} parent=0 // pred_check
    _
  $region11: #{basic_block_forward.2} parent=0 // pred_check_branch
    %13 = sbr.rel (0) target = $region13
  $region12: #{basic_block_forward.2} parent=0 // pred_region
    _
  $region13: #{basic_block_forward.2} parent=0 // pred_fallthru
    _
  %p15 = scmp.eq.s32.totalorder 0, 0
  // Predicated region
  $region14: #{basic_block_forward.2} parent=0 // pred_check
    %p16 = pneg %p15
  $region15: #{basic_block_forward.2} parent=0 // pred_check_branch
    %18 = sbr.rel (%p16) target = $region17
  $region16: #{basic_block_forward.2} parent=0 // pred_region
    %19 = vst [vmem:[#allocation2] sm:$0xff] 0.0
    %20 = vst [vmem:[#allocation2 + $0x8] sm:$0xff] 0.0
    %21 = vst [vmem:[#allocation2 + $0x10] sm:$0xff] 0.0
    %22 = vst [vmem:[#allocation2 + $0x18] sm:$0xff] 0.0
    %23 = vst [vmem:[#allocation2 + $0x20] sm:$0xff] 0.0
    %24 = vst [vmem:[#allocation2 + $0x28] sm:$0xff] 0.0
    %25 = vst [vmem:[#allocation2 + $0x30] sm:$0xff] 0.0
    %26 = vst [vmem:[#allocation2 + $0x38] sm:$0xff] 0.0
    %27 = vst [vmem:[#allocation2 + $0x40] sm:$0xff] 0.0
    %28 = vst [vmem:[#allocation2 + $0x48] sm:$0xff] 0.0
    %29 = vst [vmem:[#allocation2 + $0x50] sm:$0xff] 0.0
    %30 = vst [vmem:[#allocation2 + $0x58] sm:$0xff] 0.0
    %31 = vst [vmem:[#allocation2 + $0x60] sm:$0xff] 0.0
    %32 = vst [vmem:[#allocation2 + $0x68] sm:$0xff] 0.0
    %33 = vst [vmem:[#allocation2 + $0x70] sm:$0xff] 0.0
    %34 = vst [vmem:[#allocation2 + $0x78] sm:$0xff] 0.0
  $region17: #{basic_block_forward.2} parent=0 // pred_fallthru
    _
  %v35 = vld [vmem:[#allocation2] sm:$0xff]
  %v36 = vld [vmem:[#allocation2 + $0x8] sm:$0xff]
  %v37 = vld [vmem:[#allocation2 + $0x10] sm:$0xff]
  %v38 = vld [vmem:[#allocation2 + $0x18] sm:$0xff]
  %v39 = vld [vmem:[#allocation2 + $0x20] sm:$0xff]
  %v40 = vld [vmem:[#allocation2 + $0x28] sm:$0xff]
  %v41 = vld [vmem:[#allocation2 + $0x30] sm:$0xff]
  %v42 = vld [vmem:[#allocation2 + $0x38] sm:$0xff]
  %v43 = vld [vmem:[#allocation2 + $0x40] sm:$0xff]
  %v44 = vld [vmem:[#allocation2 + $0x48] sm:$0xff]
  %v45 = vld [vmem:[#allocation2 + $0x50] sm:$0xff]
  %v46 = vld [vmem:[#allocation2 + $0x58] sm:$0xff]
  %v47 = vld [vmem:[#allocation2 + $0x60] sm:$0xff]
  %v48 = vld [vmem:[#allocation2 + $0x68] sm:$0xff]
  %v49 = vld [vmem:[#allocation2 + $0x70] sm:$0xff]
  %v50 = vld [vmem:[#allocation2 + $0x78] sm:$0xff]
  %v51 = vld [vmem:[%s0] sm:$0xf]
  %v52 = vld [vmem:[%s0 + $0x4] sm:$0xf]
  %v53 = vld [vmem:[%s0 + $0x8] sm:$0xf]
  %v54 = vld [vmem:[%s0 + $0xc] sm:$0xf]
  %v55 = vld [vmem:[%s0 + $0x10] sm:$0xf]
  %v56 = vld [vmem:[%s0 + $0x14] sm:$0xf]
  %v57 = vld [vmem:[%s0 + $0x18] sm:$0xf]
  %v58 = vld [vmem:[%s0 + $0x1c] sm:$0xf]
  %v59 = vld [vmem:[%s0 + $0x20] sm:$0xf]
  %v60 = vld [vmem:[%s0 + $0x24] sm:$0xf]
  %v61 = vld [vmem:[%s0 + $0x28] sm:$0xf]
  %v62 = vld [vmem:[%s0 + $0x2c] sm:$0xf]
  %v63 = vld [vmem:[%s0 + $0x30] sm:$0xf]
  %v64 = vld [vmem:[%s0 + $0x34] sm:$0xf]
  %v65 = vld [vmem:[%s0 + $0x38] sm:$0xf]
  %v66 = vld [vmem:[%s0 + $0x3c] sm:$0xf]
  %v67 = vld [vmem:[%s1] sm:$0xf]
  %v68 = vld [vmem:[%s1 + $0x4] sm:$0xf]
  %v69 = vld [vmem:[%s1 + $0x8] sm:$0xf]
  %v70 = vld [vmem:[%s1 + $0xc] sm:$0xf]
  %v71 = vld [vmem:[%s1 + $0x10] sm:$0x3]
  %v88 = vunpack.c.l.b16 %v51
  %v89 = vunpack.c.l.b16 %v52
  %v90 = vunpack.c.l.b16 %v53
  %v91 = vunpack.c.l.b16 %v54
  %v92 = vunpack.c.l.b16 %v55
  %v93 = vunpack.c.l.b16 %v56
  %v94 = vunpack.c.l.b16 %v57
  %v95 = vunpack.c.l.b16 %v58
  %v96 = vunpack.c.l.b16 %v59
  %v97 = vunpack.c.l.b16 %v60
  %v98 = vunpack.c.l.b16 %v61
  %v99 = vunpack.c.l.b16 %v62
  %v100 = vunpack.c.l.b16 %v63
  %v101 = vunpack.c.l.b16 %v64
  %v102 = vunpack.c.l.b16 %v65
  %v103 = vunpack.c.l.b16 %v66
  %v104 = vpack.c.b16 %v89, %v88
  %v105 = vpack.c.b16 %v91, %v90
  %v106 = vpack.c.b16 %v93, %v92
  %v107 = vpack.c.b16 %v95, %v94
  %v108 = vpack.c.b16 %v97, %v96
  %v109 = vpack.c.b16 %v99, %v98
  %v110 = vpack.c.b16 %v101, %v100
  %v111 = vpack.c.b16 %v103, %v102
  %v117 = vunpack.c.l.b16 %v67
  %v118 = vunpack.c.l.b16 %v68
  %v119 = vunpack.c.l.b16 %v69
  %v120 = vunpack.c.l.b16 %v70
  %v121 = vunpack.c.l.b16 %v71
  %v122 = vpack.c.b16 %v118, %v117
  %v123 = vpack.c.b16 %v120, %v119
  %v124 = vpack.c.b16 %v121, %v121
  %vm127 = vcmask 293888
  %v129 = vsel %vm127, %v104, 0
  %v132 = vsel %vm127, %v105, 0
  %v135 = vsel %vm127, %v106, 0
  %v138 = vsel %vm127, %v107, 0
  %v141 = vsel %vm127, %v108, 0
  %v144 = vsel %vm127, %v109, 0
  %v147 = vsel %vm127, %v110, 0
  %v150 = vsel %vm127, %v111, 0
  %vm152 = vcmask 1041408
  %v154 = vsel %vm152, %v124, 0
  %156 = vmatprep.subr.bf16.mxu0 0
  %157 = vmatpush1.bf16.msra.mxu0 %v122
  %158 = vmatprep.subr.bf16.mxu0 0
  %159 = vmatpush1.bf16.msra.mxu0 %v123
  %160 = vmatprep.subr.bf16.mxu0 0
  %161 = vmatpush1.bf16.msra.mxu0 %v154
  %162 = vmatprep.subr.bf16.mxu0 0
  %163 = vmatpush1.bf16.msra.mxu0 0
  %164 = vmatprep.subr.bf16.mxu0 0
  %165 = vmatpush1.bf16.msra.mxu0 0
  %166 = vmatprep.subr.bf16.mxu0 0
  %167 = vmatpush1.bf16.msra.mxu0 0
  %168 = vmatprep.subr.bf16.mxu0 0
  %169 = vmatpush1.bf16.msra.mxu0 0
  %170 = vmatprep.subr.bf16.mxu0 0
  %171 = vmatpush1.bf16.msra.mxu0 0
  %172 = vmatprep.subr.bf16.mxu0 0
  %173 = vmatpush1.bf16.msra.mxu0 0
  %174 = vmatprep.subr.bf16.mxu0 0
  %175 = vmatpush1.bf16.msra.mxu0 0
  %176 = vmatprep.subr.bf16.mxu0 0
  %177 = vmatpush1.bf16.msra.mxu0 0
  %178 = vmatprep.subr.bf16.mxu0 0
  %179 = vmatpush1.bf16.msra.mxu0 0
  %180 = vmatprep.subr.bf16.mxu0 0
  %181 = vmatpush1.bf16.msra.mxu0 0
  %182 = vmatprep.subr.bf16.mxu0 0
  %183 = vmatpush1.bf16.msra.mxu0 0
  %184 = vmatprep.subr.bf16.mxu0 0
  %185 = vmatpush1.bf16.msra.mxu0 0
  %186 = vmatprep.subr.bf16.mxu0 0
  %187 = vmatpush1.bf16.msra.mxu0 0
  %188 = vmatprep.mubr.bf16.mxu0 0
  %189 = vmatmul.mubr.bf16.gmra.mrb[0].mxu0 %v129
  %v190 = vpop.f32.mrb[0].mxu0
  %v191 = vadd.f32 0.0, %v190
  %v192 = vpop.f32.mrb[0].mxu0
  %v193 = vpop.f32.mrb[0].mxu0
  %v194 = vadd.f32 0.0, %v193
  %v195 = vpop.f32.mrb[0].mxu0
  %196 = vmatprep.mubr.bf16.mxu0 0
  %197 = vmatmul.mubr.bf16.gmra.mrb[0].mxu0 %v132
  %v198 = vpop.f32.mrb[0].mxu0
  %v199 = vadd.f32 0.0, %v198
  %v200 = vpop.f32.mrb[0].mxu0
  %v201 = vpop.f32.mrb[0].mxu0
  %v202 = vadd.f32 0.0, %v201
  %v203 = vpop.f32.mrb[0].mxu0
  %204 = vmatprep.mubr.bf16.mxu0 0
  %205 = vmatmul.mubr.bf16.gmra.mrb[0].mxu0 %v135
  %v206 = vpop.f32.mrb[0].mxu0
  %v207 = vadd.f32 0.0, %v206
  %v208 = vpop.f32.mrb[0].mxu0
  %v209 = vpop.f32.mrb[0].mxu0
  %v210 = vadd.f32 0.0, %v209
  %v211 = vpop.f32.mrb[0].mxu0
  %212 = vmatprep.mubr.bf16.mxu0 0
  %213 = vmatmul.mubr.bf16.gmra.mrb[0].mxu0 %v138
  %v214 = vpop.f32.mrb[0].mxu0
  %v215 = vadd.f32 0.0, %v214
  %v216 = vpop.f32.mrb[0].mxu0
  %v217 = vpop.f32.mrb[0].mxu0
  %v218 = vadd.f32 0.0, %v217
  %v219 = vpop.f32.mrb[0].mxu0
  %220 = vmatprep.mubr.bf16.mxu0 0
  %221 = vmatmul.mubr.bf16.gmra.mrb[0].mxu0 %v141
  %v222 = vpop.f32.mrb[0].mxu0
  %v223 = vadd.f32 0.0, %v222
  %v224 = vpop.f32.mrb[0].mxu0
  %v225 = vpop.f32.mrb[0].mxu0
  %v226 = vadd.f32 0.0, %v225
  %v227 = vpop.f32.mrb[0].mxu0
  %228 = vmatprep.mubr.bf16.mxu0 0
  %229 = vmatmul.mubr.bf16.gmra.mrb[0].mxu0 %v144
  %v230 = vpop.f32.mrb[0].mxu0
  %v231 = vadd.f32 0.0, %v230
  %v232 = vpop.f32.mrb[0].mxu0
  %v233 = vpop.f32.mrb[0].mxu0
  %v234 = vadd.f32 0.0, %v233
  %v235 = vpop.f32.mrb[0].mxu0
  %236 = vmatprep.mubr.bf16.mxu0 0
  %237 = vmatmul.mubr.bf16.gmra.mrb[0].mxu0 %v147
  %v238 = vpop.f32.mrb[0].mxu0
  %v239 = vadd.f32 0.0, %v238
  %v240 = vpop.f32.mrb[0].mxu0
  %v241 = vpop.f32.mrb[0].mxu0
  %v242 = vadd.f32 0.0, %v241
  %v243 = vpop.f32.mrb[0].mxu0
  %244 = vmatprep.mubr.bf16.mxu0 0
  %245 = vmatmul.mubr.bf16.gmra.mrb[0].mxu0 %v150
  %v246 = vpop.f32.mrb[0].mxu0
  %v247 = vadd.f32 0.0, %v246
  %v248 = vpop.f32.mrb[0].mxu0
  %v249 = vpop.f32.mrb[0].mxu0
  %v250 = vadd.f32 0.0, %v249
  %v251 = vpop.f32.mrb[0].mxu0
  %252 = vdwg.mxu0
  %v253 = vadd.f32 %v35, %v191
  %v254 = vadd.f32 %v36, %v194
  %v255 = vadd.f32 %v37, %v199
  %v256 = vadd.f32 %v38, %v202
  %v257 = vadd.f32 %v39, %v207
  %v258 = vadd.f32 %v40, %v210
  %v259 = vadd.f32 %v41, %v215
  %v260 = vadd.f32 %v42, %v218
  %v261 = vadd.f32 %v43, %v223
  %v262 = vadd.f32 %v44, %v226
  %v263 = vadd.f32 %v45, %v231
  %v264 = vadd.f32 %v46, %v234
  %v265 = vadd.f32 %v47, %v239
  %v266 = vadd.f32 %v48, %v242
  %v267 = vadd.f32 %v49, %v247
  %v268 = vadd.f32 %v50, %v250
  %269 = vst [vmem:[#allocation2] sm:$0xff] %v253
  %270 = vst [vmem:[#allocation2 + $0x8] sm:$0xff] %v254
  %271 = vst [vmem:[#allocation2 + $0x10] sm:$0xff] %v255
  %272 = vst [vmem:[#allocation2 + $0x18] sm:$0xff] %v256
  %273 = vst [vmem:[#allocation2 + $0x20] sm:$0xff] %v257
  %274 = vst [vmem:[#allocation2 + $0x28] sm:$0xff] %v258
  %275 = vst [vmem:[#allocation2 + $0x30] sm:$0xff] %v259
  %276 = vst [vmem:[#allocation2 + $0x38] sm:$0xff] %v260
  %277 = vst [vmem:[#allocation2 + $0x40] sm:$0xff] %v261
  %278 = vst [vmem:[#allocation2 + $0x48] sm:$0xff] %v262
  %279 = vst [vmem:[#allocation2 + $0x50] sm:$0xff] %v263
  %280 = vst [vmem:[#allocation2 + $0x58] sm:$0xff] %v264
  %281 = vst [vmem:[#allocation2 + $0x60] sm:$0xff] %v265
  %282 = vst [vmem:[#allocation2 + $0x68] sm:$0xff] %v266
  %283 = vst [vmem:[#allocation2 + $0x70] sm:$0xff] %v267
  %284 = vst [vmem:[#allocation2 + $0x78] sm:$0xff] %v268
  // Predicated region
  $region18: #{basic_block_forward.2} parent=0 // pred_check
    %p285 = pneg %p15
  $region19: #{basic_block_forward.2} parent=0 // pred_check_branch
    %287 = sbr.rel (%p285) target = $region21
  $region20: #{basic_block_forward.2} parent=0 // pred_region
    %v288 = vld [vmem:[#allocation2] sm:$0xff]
    %v289 = vld [vmem:[#allocation2 + $0x8] sm:$0xff]
    %v290 = vld [vmem:[#allocation2 + $0x10] sm:$0xff]
    %v291 = vld [vmem:[#allocation2 + $0x18] sm:$0xff]
    %v292 = vld [vmem:[#allocation2 + $0x20] sm:$0xff]
    %v293 = vld [vmem:[#allocation2 + $0x28] sm:$0xff]
    %v294 = vld [vmem:[#allocation2 + $0x30] sm:$0xff]
    %v295 = vld [vmem:[#allocation2 + $0x38] sm:$0xff]
    %v296 = vld [vmem:[#allocation2 + $0x40] sm:$0xff]
    %v297 = vld [vmem:[#allocation2 + $0x48] sm:$0xff]
    %v298 = vld [vmem:[#allocation2 + $0x50] sm:$0xff]
    %v299 = vld [vmem:[#allocation2 + $0x58] sm:$0xff]
    %v300 = vld [vmem:[#allocation2 + $0x60] sm:$0xff]
    %v301 = vld [vmem:[#allocation2 + $0x68] sm:$0xff]
    %v302 = vld [vmem:[#allocation2 + $0x70] sm:$0xff]
    %v303 = vld [vmem:[#allocation2 + $0x78] sm:$0xff]
    %v304 = vld [vmem:[%s2] sm:$0x1]
    %v306 = vlaneseq
    %v307 = vshrl.u32 %v306, 7
    %v308 = vsub.s32 0, %v307
    %v309 = vrot.slane %v304, %v308
    %v311 = vadd.f32 %v288, %v309
    %v312 = vadd.f32 %v289, %v309
    %v313 = vadd.f32 %v290, %v309
    %v314 = vadd.f32 %v291, %v309
    %v315 = vadd.f32 %v292, %v309
    %v316 = vadd.f32 %v293, %v309
    %v317 = vadd.f32 %v294, %v309
    %v318 = vadd.f32 %v295, %v309
    %v319 = vadd.f32 %v296, %v309
    %v320 = vadd.f32 %v297, %v309
    %v321 = vadd.f32 %v298, %v309
    %v322 = vadd.f32 %v299, %v309
    %v323 = vadd.f32 %v300, %v309
    %v324 = vadd.f32 %v301, %v309
    %v325 = vadd.f32 %v302, %v309
    %v326 = vadd.f32 %v303, %v309
    %v327 = vmax.f32 %v311, 0.0
    %v328 = vmax.f32 %v312, 0.0
    %v329 = vmax.f32 %v313, 0.0
    %v330 = vmax.f32 %v314, 0.0
    %v331 = vmax.f32 %v315, 0.0
    %v332 = vmax.f32 %v316, 0.0
    %v333 = vmax.f32 %v317, 0.0
    %v334 = vmax.f32 %v318, 0.0
    %v335 = vmax.f32 %v319, 0.0
    %v336 = vmax.f32 %v320, 0.0
    %v337 = vmax.f32 %v321, 0.0
    %v338 = vmax.f32 %v322, 0.0
    %v339 = vmax.f32 %v323, 0.0
    %v340 = vmax.f32 %v324, 0.0
    %v341 = vmax.f32 %v325, 0.0
    %v342 = vmax.f32 %v326, 0.0
    %v343 = vpack.c.bf16 %v328, %v327
    %v344 = vpack.c.bf16 %v330, %v329
    %v345 = vpack.c.bf16 %v332, %v331
    %v346 = vpack.c.bf16 %v334, %v333
    %v347 = vpack.c.bf16 %v336, %v335
    %v348 = vpack.c.bf16 %v338, %v337
    %v349 = vpack.c.bf16 %v340, %v339
    %v350 = vpack.c.bf16 %v342, %v341
    %v359 = vunpack.c.l.b16 %v343
    %v360 = vunpack.c.h.b16 %v343
    %v361 = vunpack.c.l.b16 %v344
    %v362 = vunpack.c.h.b16 %v344
    %v363 = vunpack.c.l.b16 %v345
    %v364 = vunpack.c.h.b16 %v345
    %v365 = vunpack.c.l.b16 %v346
    %v366 = vunpack.c.h.b16 %v346
    %v367 = vunpack.c.l.b16 %v347
    %v368 = vunpack.c.h.b16 %v347
    %v369 = vunpack.c.l.b16 %v348
    %v370 = vunpack.c.h.b16 %v348
    %v371 = vunpack.c.l.b16 %v349
    %v372 = vunpack.c.h.b16 %v349
    %v373 = vunpack.c.l.b16 %v350
    %v374 = vunpack.c.h.b16 %v350
    %v375 = vpack.c.b16 %v359, %v359
    %v376 = vpack.c.b16 %v360, %v360
    %v377 = vpack.c.b16 %v361, %v361
    %v378 = vpack.c.b16 %v362, %v362
    %v379 = vpack.c.b16 %v363, %v363
    %v380 = vpack.c.b16 %v364, %v364
    %v381 = vpack.c.b16 %v365, %v365
    %v382 = vpack.c.b16 %v366, %v366
    %v383 = vpack.c.b16 %v367, %v367
    %v384 = vpack.c.b16 %v368, %v368
    %v385 = vpack.c.b16 %v369, %v369
    %v386 = vpack.c.b16 %v370, %v370
    %v387 = vpack.c.b16 %v371, %v371
    %v388 = vpack.c.b16 %v372, %v372
    %v389 = vpack.c.b16 %v373, %v373
    %v390 = vpack.c.b16 %v374, %v374
    %407 = vst [vmem:[%s3] sm:$0xf] %v375
    %408 = vst [vmem:[%s3 + $0x4] sm:$0xf] %v376
    %409 = vst [vmem:[%s3 + $0x8] sm:$0xf] %v377
    %410 = vst [vmem:[%s3 + $0xc] sm:$0xf] %v378
    %411 = vst [vmem:[%s3 + $0x10] sm:$0xf] %v379
    %412 = vst [vmem:[%s3 + $0x14] sm:$0xf] %v380
    %413 = vst [vmem:[%s3 + $0x18] sm:$0xf] %v381
    %414 = vst [vmem:[%s3 + $0x1c] sm:$0xf] %v382
    %415 = vst [vmem:[%s3 + $0x20] sm:$0xf] %v383
    %416 = vst [vmem:[%s3 + $0x24] sm:$0xf] %v384
    %417 = vst [vmem:[%s3 + $0x28] sm:$0xf] %v385
    %418 = vst [vmem:[%s3 + $0x2c] sm:$0xf] %v386
    %419 = vst [vmem:[%s3 + $0x30] sm:$0xf] %v387
    %420 = vst [vmem:[%s3 + $0x34] sm:$0xf] %v388
    %421 = vst [vmem:[%s3 + $0x38] sm:$0xf] %v389
    %422 = vst [vmem:[%s3 + $0x3c] sm:$0xf] %v390
  $region21: #{basic_block_forward.2} parent=0 // pred_fallthru
    _
  // Predicated region
  $region22: #{basic_block_forward.2} parent=0 // pred_check
    _
  $region23: #{basic_block_forward.2} parent=0 // pred_check_branch
    %424 = sbr.rel (0) target = $region25
  $region24: #{basic_block_forward.2} parent=0 // pred_region
    _
  $region25: #{basic_block_forward.2} parent=0 // pred_fallthru
    _
  // Predicated region
  $region26: #{basic_block_forward.2} parent=0 // pred_check
    _
  $region27: #{basic_block_forward.2} parent=0 // pred_check_branch
    %426 = sbr.rel (0) target = $region29
  $region28: #{basic_block_forward.2} parent=0 // pred_region
    _
  $region29: #{basic_block_forward.2} parent=0 // pred_fallthru
    _

// kernel: basic_block_forward.3
$region0: #{basic_block_forward.3}
  #allocation0 [shape = 'u32[]', space=smem, size = 0x4, offset = 0x4, fixed_abs, tag = 'smem constant byte address 0x4 - core index']
  #allocation1 [shape = 'u32[144,128]{1,0:T(1,128)}', space=vmem, size = 0x12000, scoped, tag = 'internal scratch']
  %s0 = inlined_call_operand.vmem [shape: bf16[2,122,128], index: 0, kind: input, shape index: {}]
  %s1 = inlined_call_operand.vmem [shape: bf16[9,128,128], index: 1, kind: input, shape index: {}]
  %s2 = inlined_call_operand.vmem [shape: f32[1,128], index: 2, kind: input, shape index: {}]
  %s3 = inlined_call_operand.vmem [shape: bf16[2,100,4], index: 3, kind: input, shape index: {}]
  %s4 = inlined_call_operand.vmem [shape: bf16[4,128], index: 4, kind: input, shape index: {}]
  %s5 = inlined_call_operand.vmem [shape: f32[2,100,128], index: 5, kind: output, shape index: {}]
  %s6 = sld [smem:[#allocation0]]
  $region53: #{basic_block_forward.3} parent=0
    _
  %s8 = ssub.s32 1, %s6
  %s9 = scalar_select 0, %s8, %s6
  loop: start=0, step=1, limit=4
  $region2: #{basic_block_forward.3} parent=0 // loop_pre_header
    _
  $region3: #{basic_block_forward.3} parent=0 // loop_header
    %s11 = sphi 0, %s15
    %p12 = scmp.ge.s32.totalorder %s11, 4
    %s21 = sphi 0, %s23
    %s24 = sphi 0, %s21
    %s25 = sphi 0, %s24
    %s41 = sphi 0, %s25
    %s45 = sphi 0, %s45
    %s47 = sphi 0, %s45
    %s48 = sphi 0, %s47
    %s62 = sphi 0, %s48
    %s66 = sphi 0, %s66
    %s68 = sphi 0, %s66
    %s69 = sphi 0, %s68
    %s83 = sphi 0, %s69
    %s89 = sphi 0, %s91
    %s92 = sphi 0, %s89
    %s93 = sphi 0, %s92
    %s109 = sphi 0, %s93
    %s113 = sphi 0, %s113
    %s115 = sphi 0, %s113
    %s116 = sphi 0, %s115
    %s130 = sphi 0, %s116
    %s136 = sphi 0, %s138
    %s139 = sphi 0, %s136
    %s140 = sphi 0, %s139
    %s156 = sphi 0, %s140
  $region4: #{basic_block_forward.3} parent=0 // loop_header_branch
    %14 = sbr.rel (%p12) target = $region8
  $region5: #{basic_block_forward.3} parent=0 // loop_body
    %s16 = ssub.s32 %s11, 1
    %s17 = ssub.s32 %s11, 2
    %s18 = sadd.s32 %s11, 1
    %s19 = ssub.s32 %s11, %s18
    %p20 = scmp.eq.s32.totalorder %s19, 0
    %s22 = sadd.s32 %s21, 1
    %s23 = scalar_select %p20, %s21, %s22
    %p26 = pneg %p20
    %p27 = scmp.eq.s32.totalorder %s11, 1
    %p28 = por %p26, %p27
    %p29 = scmp.ne.s32.totalorder %s21, %s24
    %p30 = scmp.eq.s32.totalorder %s11, 0
    %p31 = por %p29, %p30
    %p32 = scmp.ne.s32.totalorder %s21, %s24
    %p33 = scmp.eq.s32.totalorder %s16, 1
    %p34 = por %p32, %p33
    %p35 = scmp.ne.s32.totalorder %s24, %s25
    %p36 = scmp.eq.s32.totalorder %s16, 0
    %p37 = por %p35, %p36
    %p38 = scmp.ne.s32.totalorder %s24, %s25
    %p39 = scmp.eq.s32.totalorder %s17, 1
    %p40 = por %p38, %p39
    %p42 = scmp.ne.s32.totalorder %s25, %s41
    %p43 = scmp.eq.s32.totalorder %s17, 0
    %p44 = por %p42, %p43
    %s46 = sadd.s32 %s45, 1
    %p49 = scmp.eq.s32.totalorder %s11, 1
    %p50 = scmp.ne.s32.totalorder %s45, %s47
    %p51 = scmp.eq.s32.totalorder %s11, 0
    %p52 = por %p50, %p51
    %p53 = scmp.ne.s32.totalorder %s45, %s47
    %p54 = scmp.eq.s32.totalorder %s16, 1
    %p55 = por %p53, %p54
    %p56 = scmp.ne.s32.totalorder %s47, %s48
    %p57 = scmp.eq.s32.totalorder %s16, 0
    %p58 = por %p56, %p57
    %p59 = scmp.ne.s32.totalorder %s47, %s48
    %p60 = scmp.eq.s32.totalorder %s17, 1
    %p61 = por %p59, %p60
    %p63 = scmp.ne.s32.totalorder %s48, %s62
    %p64 = scmp.eq.s32.totalorder %s17, 0
    %p65 = por %p63, %p64
    %s67 = sadd.s32 %s66, 1
    %p70 = scmp.eq.s32.totalorder %s11, 1
    %p71 = scmp.ne.s32.totalorder %s66, %s68
    %p72 = scmp.eq.s32.totalorder %s11, 0
    %p73 = por %p71, %p72
    %p74 = scmp.ne.s32.totalorder %s66, %s68
    %p75 = scmp.eq.s32.totalorder %s16, 1
    %p76 = por %p74, %p75
    %p77 = scmp.ne.s32.totalorder %s68, %s69
    %p78 = scmp.eq.s32.totalorder %s16, 0
    %p79 = por %p77, %p78
    %p80 = scmp.ne.s32.totalorder %s68, %s69
    %p81 = scmp.eq.s32.totalorder %s17, 1
    %p82 = por %p80, %p81
    %p84 = scmp.ne.s32.totalorder %s69, %s83
    %p85 = scmp.eq.s32.totalorder %s17, 0
    %p86 = por %p84, %p85
    %s87 = ssub.s32 %s11, %s18
    %p88 = scmp.eq.s32.totalorder %s87, 0
    %s90 = sadd.s32 %s89, 1
    %s91 = scalar_select %p88, %s89, %s90
    %p94 = pneg %p88
    %p95 = scmp.eq.s32.totalorder %s11, 1
    %p96 = por %p94, %p95
    %p97 = scmp.ne.s32.totalorder %s89, %s92
    %p98 = scmp.eq.s32.totalorder %s11, 0
    %p99 = por %p97, %p98
    %p100 = scmp.ne.s32.totalorder %s89, %s92
    %p101 = scmp.eq.s32.totalorder %s16, 1
    %p102 = por %p100, %p101
    %p103 = scmp.ne.s32.totalorder %s92, %s93
    %p104 = scmp.eq.s32.totalorder %s16, 0
    %p105 = por %p103, %p104
    %p106 = scmp.ne.s32.totalorder %s92, %s93
    %p107 = scmp.eq.s32.totalorder %s17, 1
    %p108 = por %p106, %p107
    %p110 = scmp.ne.s32.totalorder %s93, %s109
    %p111 = scmp.eq.s32.totalorder %s17, 0
    %p112 = por %p110, %p111
    %s114 = sadd.s32 %s113, 1
    %p117 = scmp.eq.s32.totalorder %s11, 1
    %p118 = scmp.ne.s32.totalorder %s113, %s115
    %p119 = scmp.eq.s32.totalorder %s11, 0
    %p120 = por %p118, %p119
    %p121 = scmp.ne.s32.totalorder %s113, %s115
    %p122 = scmp.eq.s32.totalorder %s16, 1
    %p123 = por %p121, %p122
    %p124 = scmp.ne.s32.totalorder %s115, %s116
    %p125 = scmp.eq.s32.totalorder %s16, 0
    %p126 = por %p124, %p125
    %p127 = scmp.ne.s32.totalorder %s115, %s116
    %p128 = scmp.eq.s32.totalorder %s17, 1
    %p129 = por %p127, %p128
    %p131 = scmp.ne.s32.totalorder %s116, %s130
    %p132 = scmp.eq.s32.totalorder %s17, 0
    %p133 = por %p131, %p132
    %s134 = ssub.s32 %s11, %s18
    %p135 = scmp.eq.s32.totalorder %s134, 0
    %s137 = sadd.s32 %s136, 1
    %s138 = scalar_select %p135, %s136, %s137
    %p141 = pneg %p135
    %p142 = scmp.eq.s32.totalorder %s11, 1
    %p143 = por %p141, %p142
    %p144 = scmp.ne.s32.totalorder %s136, %s139
    %p145 = scmp.eq.s32.totalorder %s11, 0
    %p146 = por %p144, %p145
    %p147 = scmp.ne.s32.totalorder %s136, %s139
    %p148 = scmp.eq.s32.totalorder %s16, 1
    %p149 = por %p147, %p148
    %p150 = scmp.ne.s32.totalorder %s139, %s140
    %p151 = scmp.eq.s32.totalorder %s16, 0
    %p152 = por %p150, %p151
    %p153 = scmp.ne.s32.totalorder %s139, %s140
    %p154 = scmp.eq.s32.totalorder %s17, 1
    %p155 = por %p153, %p154
    %p157 = scmp.ne.s32.totalorder %s140, %s156
    %p158 = scmp.eq.s32.totalorder %s17, 0
    %p159 = por %p157, %p158
    %p160 = scmp.le.s32.totalorder 1, %s11
    %p161 = scmp.lt.s32.totalorder %s11, 3
    %p162 = pnand %p160, %p161
    %p163 = pneg %p162
    // Predicated region
    $region9: #{basic_block_forward.3} parent=5 // pred_check
      _
    $region10: #{basic_block_forward.3} parent=5 // pred_check_branch
      %165 = sbr.rel (%p162) target = $region12
    $region11: #{basic_block_forward.3} parent=5 // pred_region
      %s166 = ssub.s32 %s11, 1
      // Predicated region
      $region13: #{basic_block_forward.3} parent=11 // pred_check
        %p167 = pneg %p58
      $region14: #{basic_block_forward.3} parent=11 // pred_check_branch
        %169 = sbr.rel (%p167) target = $region16
      $region15: #{basic_block_forward.3} parent=11 // pred_region
        _
      $region16: #{basic_block_forward.3} parent=11 // pred_fallthru
        _
      // Predicated region
      $region17: #{basic_block_forward.3} parent=11 // pred_check
        %p170 = pneg %p79
      $region18: #{basic_block_forward.3} parent=11 // pred_check_branch
        %172 = sbr.rel (%p170) target = $region20
      $region19: #{basic_block_forward.3} parent=11 // pred_region
        _
      $region20: #{basic_block_forward.3} parent=11 // pred_fallthru
        _
      // Predicated region
      $region21: #{basic_block_forward.3} parent=11 // pred_check
        %p173 = pneg %p126
      $region22: #{basic_block_forward.3} parent=11 // pred_check_branch
        %175 = sbr.rel (%p173) target = $region24
      $region23: #{basic_block_forward.3} parent=11 // pred_region
        _
      $region24: #{basic_block_forward.3} parent=11 // pred_fallthru
        _
    $region12: #{basic_block_forward.3} parent=5 // pred_fallthru
      _
    %p176 = scmp.lt.s32.totalorder %s11, 2
    // Predicated region
    $region25: #{basic_block_forward.3} parent=5 // pred_check
      %p177 = pneg %p176
    $region26: #{basic_block_forward.3} parent=5 // pred_check_branch
      %179 = sbr.rel (%p177) target = $region28
    $region27: #{basic_block_forward.3} parent=5 // pred_region
      // Predicated region
      $region29: #{basic_block_forward.3} parent=27 // pred_check
        %p180 = pneg %p31
      $region30: #{basic_block_forward.3} parent=27 // pred_check_branch
        %182 = sbr.rel (%p180) target = $region32
      $region31: #{basic_block_forward.3} parent=27 // pred_region
        %p183 = scmp.lt.s32.totalorder %s11, 1
        %s184 = scalar_select %p183, %s11, 1
        %s185 = smul.addr %s184, 16
        %s186 = smul.addr %s185, 4
        %s187 = scalar_lea.vmem %s0, %s186
      $region32: #{basic_block_forward.3} parent=27 // pred_fallthru
        _
      // Predicated region
      $region33: #{basic_block_forward.3} parent=27 // pred_check
        %p188 = pneg %p99
      $region34: #{basic_block_forward.3} parent=27 // pred_check_branch
        %190 = sbr.rel (%p188) target = $region36
      $region35: #{basic_block_forward.3} parent=27 // pred_region
        %p191 = scmp.lt.s32.totalorder %s11, 1
        %s192 = scalar_select %p191, %s11, 1
        %s193 = smul.addr %s192, 13
        %s194 = smul.addr %s193, 4
        %s195 = scalar_lea.vmem %s3, %s194
      $region36: #{basic_block_forward.3} parent=27 // pred_fallthru
        _
    $region28: #{basic_block_forward.3} parent=5 // pred_fallthru
      _
    %p196 = scmp.le.s32.totalorder 1, %s11
    %p197 = scmp.lt.s32.totalorder %s11, 3
    %p198 = pnand %p196, %p197
    %p199 = pneg %p198
    // Predicated region
    $region37: #{basic_block_forward.3} parent=5 // pred_check
      _
    $region38: #{basic_block_forward.3} parent=5 // pred_check_branch
      %201 = sbr.rel (%p198) target = $region40
    $region39: #{basic_block_forward.3} parent=5 // pred_region
      %s202 = ssub.s32 %s11, 1
      %p203 = scmp.lt.s32.totalorder %s16, 1
      %s204 = scalar_select %p203, %s16, 1
      %s205 = smul.addr %s204, 16
      %s206 = smul.addr %s205, 4
      %s207 = scalar_lea.vmem %s0, %s206
      %p208 = pneg %p37
      %p209 = pneg %p34
      %p210 = pneg %p58
      %p211 = pneg %p55
      %p212 = pneg %p79
      %p213 = pneg %p76
      %p214 = scmp.lt.s32.totalorder %s16, 1
      %s215 = scalar_select %p214, %s16, 1
      %s216 = smul.addr %s215, 13
      %s217 = smul.addr %s216, 4
      %s218 = scalar_lea.vmem %s3, %s217
      %p219 = pneg %p105
      %p220 = pneg %p102
      %p221 = pneg %p126
      %p222 = pneg %p123
      %p223 = pneg %p152
      %p224 = pneg %p149
      %p225 = scmp.lt.s32.totalorder %s16, 1
      %s226 = scalar_select %p225, %s16, 1
      %s227 = smul.addr %s226, 13
      %s228 = smul.addr %s227, 8
      %s229 = scalar_lea.vmem %s5, %s228
      %p230 = scmp.lt.s32.totalorder %s16, 1
      %s231 = scalar_select %p230, %s16, 1
      %s232 = smul.addr %s231, 16
      %s233 = smul.addr %s232, 4
      %s234 = scalar_lea.vmem %s0, %s233
      %p235 = scmp.lt.s32.totalorder %s16, 1
      %s236 = scalar_select %p235, %s16, 1
      %s237 = smul.addr %s236, 13
      %s238 = smul.addr %s237, 4
      %s239 = scalar_lea.vmem %s3, %s238
      %p240 = scmp.lt.s32.totalorder %s16, 1
      %s241 = scalar_select %p240, %s16, 1
      %s242 = smul.addr %s241, 13
      %s243 = smul.addr %s242, 8
      %s244 = scalar_lea.vmem %s5, %s243
      %v246 = vld [vmem:[%s234] sm:$0xf]
      %v247 = vld [vmem:[%s234 + $0x4] sm:$0xf]
      %v248 = vld [vmem:[%s234 + $0x8] sm:$0xf]
      %v249 = vld [vmem:[%s234 + $0xc] sm:$0xf]
      %v250 = vld [vmem:[%s234 + $0x10] sm:$0xf]
      %v251 = vld [vmem:[%s234 + $0x14] sm:$0xf]
      %v252 = vld [vmem:[%s234 + $0x18] sm:$0xf]
      %v253 = vld [vmem:[%s234 + $0x1c] sm:$0xf]
      %v254 = vld [vmem:[%s234 + $0x20] sm:$0xf]
      %v255 = vld [vmem:[%s234 + $0x24] sm:$0xf]
      %v256 = vld [vmem:[%s234 + $0x28] sm:$0xf]
      %v257 = vld [vmem:[%s234 + $0x2c] sm:$0xf]
      %v258 = vld [vmem:[%s234 + $0x30] sm:$0x3]
      %v259 = vld [vmem:[%s1] sm:$0xf]
      %v260 = vld [vmem:[%s1 + $0x4] sm:$0xf]
      %v261 = vld [vmem:[%s1 + $0x8] sm:$0xf]
      %v262 = vld [vmem:[%s1 + $0xc] sm:$0xf]
      %v263 = vld [vmem:[%s1 + $0x10] sm:$0xf]
      %v264 = vld [vmem:[%s1 + $0x14] sm:$0xf]
      %v265 = vld [vmem:[%s1 + $0x18] sm:$0xf]
      %v266 = vld [vmem:[%s1 + $0x1c] sm:$0xf]
      %v267 = vld [vmem:[%s1 + $0x20] sm:$0xf]
      %v268 = vld [vmem:[%s1 + $0x24] sm:$0xf]
      %v269 = vld [vmem:[%s1 + $0x28] sm:$0xf]
      %v270 = vld [vmem:[%s1 + $0x2c] sm:$0xf]
      %v271 = vld [vmem:[%s1 + $0x30] sm:$0xf]
      %v272 = vld [vmem:[%s1 + $0x34] sm:$0xf]
      %v273 = vld [vmem:[%s1 + $0x38] sm:$0xf]
      %v274 = vld [vmem:[%s1 + $0x3c] sm:$0xf]
      %v275 = vld [vmem:[%s234 + $0x30] sm:$0x7]
      %s276 = scalar_lea.vmem %s1, 64
      %v277 = vld [vmem:[%s276] sm:$0xf]
      %v278 = vld [vmem:[%s276 + $0x4] sm:$0xf]
      %v279 = vld [vmem:[%s276 + $0x8] sm:$0xf]
      %v280 = vld [vmem:[%s276 + $0xc] sm:$0xf]
      %v281 = vld [vmem:[%s276 + $0x10] sm:$0xf]
      %v282 = vld [vmem:[%s276 + $0x14] sm:$0xf]
      %v283 = vld [vmem:[%s276 + $0x18] sm:$0xf]
      %v284 = vld [vmem:[%s276 + $0x1c] sm:$0xf]
      %v285 = vld [vmem:[%s276 + $0x20] sm:$0xf]
      %v286 = vld [vmem:[%s276 + $0x24] sm:$0xf]
      %v287 = vld [vmem:[%s276 + $0x28] sm:$0xf]
      %v288 = vld [vmem:[%s276 + $0x2c] sm:$0xf]
      %v289 = vld [vmem:[%s276 + $0x30] sm:$0xf]
      %v290 = vld [vmem:[%s276 + $0x34] sm:$0xf]
      %v291 = vld [vmem:[%s276 + $0x38] sm:$0xf]
      %v292 = vld [vmem:[%s276 + $0x3c] sm:$0xf]
      %v306 = vunpack.c.l.b16 %v246
      %v307 = vunpack.c.l.b16 %v247
      %v308 = vunpack.c.l.b16 %v248
      %v309 = vunpack.c.l.b16 %v249
      %v310 = vunpack.c.l.b16 %v250
      %v311 = vunpack.c.l.b16 %v251
      %v312 = vunpack.c.l.b16 %v252
      %v313 = vunpack.c.l.b16 %v253
      %v314 = vunpack.c.l.b16 %v254
      %v315 = vunpack.c.l.b16 %v255
      %v316 = vunpack.c.l.b16 %v256
      %v317 = vunpack.c.l.b16 %v257
      %v318 = vunpack.c.l.b16 %v275
      %v319 = vpack.c.b16 %v307, %v306
      %v320 = vpack.c.b16 %v309, %v308
      %v321 = vpack.c.b16 %v311, %v310
      %v322 = vpack.c.b16 %v313, %v312
      %v323 = vpack.c.b16 %v315, %v314
      %v324 = vpack.c.b16 %v317, %v316
      %v325 = vpack.c.b16 %v318, %v318
      %vm326 = vsmask.f32 7424
      %v328 = vshrl.u32 %v319, 16
      %v330 = vshll.u32 %v319, 16
      %v332 = vrot.slane %v330, 1
      %v333 = vor.u32 %v328, %v332
      %v335 = vshll.u32 %v320, 16
      %v337 = vrot.slane %v335, 1
      %v338 = vsel %vm326, %v333, %v337
      %v339 = vshrl.u32 %v320, 16
      %v341 = vor.u32 %v339, %v337
      %v343 = vshll.u32 %v321, 16
      %v345 = vrot.slane %v343, 1
      %v346 = vsel %vm326, %v341, %v345
      %v347 = vshrl.u32 %v321, 16
      %v349 = vor.u32 %v347, %v345
      %v351 = vshll.u32 %v322, 16
      %v353 = vrot.slane %v351, 1
      %v354 = vsel %vm326, %v349, %v353
      %v355 = vshrl.u32 %v322, 16
      %v357 = vor.u32 %v355, %v353
      %v359 = vshll.u32 %v323, 16
      %v361 = vrot.slane %v359, 1
      %v362 = vsel %vm326, %v357, %v361
      %v363 = vshrl.u32 %v323, 16
      %v365 = vor.u32 %v363, %v361
      %v367 = vshll.u32 %v324, 16
      %v369 = vrot.slane %v367, 1
      %v370 = vsel %vm326, %v365, %v369
      %v371 = vshrl.u32 %v324, 16
      %v373 = vor.u32 %v371, %v369
      %v375 = vshll.u32 %v325, 16
      %v377 = vrot.slane %v375, 1
      %v378 = vsel %vm326, %v373, %v377
      %v379 = vshrl.u32 %v325, 16
      %v381 = vor.u32 %v379, %v377
      %v405 = vunpack.c.l.b16 %v277
      %v406 = vunpack.c.l.b16 %v278
      %v407 = vunpack.c.l.b16 %v279
      %v408 = vunpack.c.l.b16 %v280
      %v409 = vunpack.c.l.b16 %v281
      %v410 = vunpack.c.l.b16 %v282
      %v411 = vunpack.c.l.b16 %v283
      %v412 = vunpack.c.l.b16 %v284
      %v413 = vunpack.c.l.b16 %v285
      %v414 = vunpack.c.l.b16 %v286
      %v415 = vunpack.c.l.b16 %v287
      %v416 = vunpack.c.l.b16 %v288
      %v417 = vunpack.c.l.b16 %v289
      %v418 = vunpack.c.l.b16 %v290
      %v419 = vunpack.c.l.b16 %v291
      %v420 = vunpack.c.l.b16 %v292
      %v421 = vpack.c.b16 %v406, %v405
      %v422 = vpack.c.b16 %v408, %v407
      %v423 = vpack.c.b16 %v410, %v409
      %v424 = vpack.c.b16 %v412, %v411
      %v425 = vpack.c.b16 %v414, %v413
      %v426 = vpack.c.b16 %v416, %v415
      %v427 = vpack.c.b16 %v418, %v417
      %v428 = vpack.c.b16 %v420, %v419
      %437 = vmatprep.subr.bf16.mxu0 0
      %438 = vmatpush1.bf16.msra.mxu0 %v421
      %439 = vmatprep.subr.bf16.mxu0 0
      %440 = vmatpush1.bf16.msra.mxu0 %v422
      %441 = vmatprep.subr.bf16.mxu0 0
      %442 = vmatpush1.bf16.msra.mxu0 %v423
      %443 = vmatprep.subr.bf16.mxu0 0
      %444 = vmatpush1.bf16.msra.mxu0 %v424
      %445 = vmatprep.subr.bf16.mxu0 0
      %446 = vmatpush1.bf16.msra.mxu0 %v425
      %447 = vmatprep.subr.bf16.mxu0 0
      %448 = vmatpush1.bf16.msra.mxu0 %v426
      %449 = vmatprep.subr.bf16.mxu0 0
      %450 = vmatpush1.bf16.msra.mxu0 %v427
      %451 = vmatprep.subr.bf16.mxu0 0
      %452 = vmatpush1.bf16.msra.mxu0 %v428
      %453 = vmatprep.subr.bf16.mxu0 0
      %454 = vmatpush1.bf16.msra.mxu0 0
      %455 = vmatprep.subr.bf16.mxu0 0
      %456 = vmatpush1.bf16.msra.mxu0 0
      %457 = vmatprep.subr.bf16.mxu0 0
      %458 = vmatpush1.bf16.msra.mxu0 0
      %459 = vmatprep.subr.bf16.mxu0 0
      %460 = vmatpush1.bf16.msra.mxu0 0
      %461 = vmatprep.subr.bf16.mxu0 0
      %462 = vmatpush1.bf16.msra.mxu0 0
      %463 = vmatprep.subr.bf16.mxu0 0
      %464 = vmatpush1.bf16.msra.mxu0 0
      %465 = vmatprep.subr.bf16.mxu0 0
      %466 = vmatpush1.bf16.msra.mxu0 0
      %467 = vmatprep.subr.bf16.mxu0 0
      %468 = vmatpush1.bf16.msra.mxu0 0
      %469 = vmatprep.mubr.bf16.mxu0 0
      %470 = vmatmul.mubr.bf16.gmra.mrb[0].mxu0 %v338
      %v471 = vpop.f32.mrb[0].mxu0
      %v472 = vadd.f32 0.0, %v471
      %v473 = vpop.f32.mrb[0].mxu0
      %v474 = vpop.f32.mrb[0].mxu0
      %v475 = vadd.f32 0.0, %v474
      %v476 = vpop.f32.mrb[0].mxu0
      %477 = vmatprep.mubr.bf16.mxu0 0
      %478 = vmatmul.mubr.bf16.gmra.mrb[0].mxu0 %v346
      %v479 = vpop.f32.mrb[0].mxu0
      %v480 = vadd.f32 0.0, %v479
      %v481 = vpop.f32.mrb[0].mxu0
      %v482 = vpop.f32.mrb[0].mxu0
      %v483 = vadd.f32 0.0, %v482
      %v484 = vpop.f32.mrb[0].mxu0
      %485 = vmatprep.mubr.bf16.mxu0 0
      %486 = vmatmul.mubr.bf16.gmra.mrb[0].mxu0 %v354
      %v487 = vpop.f32.mrb[0].mxu0
      %v488 = vadd.f32 0.0, %v487
      %v489 = vpop.f32.mrb[0].mxu0
      %v490 = vpop.f32.mrb[0].mxu0
      %v491 = vadd.f32 0.0, %v490
      %v492 = vpop.f32.mrb[0].mxu0
      %493 = vmatprep.mubr.bf16.mxu0 0
      %494 = vmatmul.mubr.bf16.gmra.mrb[0].mxu0 %v362
      %v495 = vpop.f32.mrb[0].mxu0
      %v496 = vadd.f32 0.0, %v495
      %v497 = vpop.f32.mrb[0].mxu0
      %v498 = vpop.f32.mrb[0].mxu0
      %v499 = vadd.f32 0.0, %v498
      %v500 = vpop.f32.mrb[0].mxu0
      %501 = vmatprep.mubr.bf16.mxu0 0
      %502 = vmatmul.mubr.bf16.gmra.mrb[0].mxu0 %v370
      %v503 = vpop.f32.mrb[0].mxu0
      %v504 = vadd.f32 0.0, %v503
      %v505 = vpop.f32.mrb[0].mxu0
      %v506 = vpop.f32.mrb[0].mxu0
      %v507 = vadd.f32 0.0, %v506
      %v508 = vpop.f32.mrb[0].mxu0
      %509 = vmatprep.mubr.bf16.mxu0 0
      %510 = vmatmul.mubr.bf16.gmra.mrb[0].mxu0 %v378
      %v511 = vpop.f32.mrb[0].mxu0
      %v512 = vadd.f32 0.0, %v511
      %v513 = vpop.f32.mrb[0].mxu0
      %v514 = vpop.f32.mrb[0].mxu0
      %v515 = vadd.f32 0.0, %v514
      %v516 = vpop.f32.mrb[0].mxu0
      %517 = vmatprep.mubr.bf16.mxu0 0
      %518 = vmatmul.mubr.bf16.gmra.mrb[0].mxu0 %v381
      %v519 = vpop.f32.mrb[0].mxu0
      %v520 = vadd.f32 0.0, %v519
      %v521 = vpop.f32.mrb[0].mxu0
      %v522 = vpop.f32.mrb[0].mxu0
      %v523 = vpop.f32.mrb[0].mxu0
      %524 = vdwg.mxu0
      %v526 = vunpack.c.l.b16 %v258
      %v527 = vpack.c.b16 %v526, %v526
      %v551 = vunpack.c.l.b16 %v259
      %v552 = vunpack.c.l.b16 %v260
      %v553 = vunpack.c.l.b16 %v261
      %v554 = vunpack.c.l.b16 %v262
      %v555 = vunpack.c.l.b16 %v263
      %v556 = vunpack.c.l.b16 %v264
      %v557 = vunpack.c.l.b16 %v265
      %v558 = vunpack.c.l.b16 %v266
      %v559 = vunpack.c.l.b16 %v267
      %v560 = vunpack.c.l.b16 %v268
      %v561 = vunpack.c.l.b16 %v269
      %v562 = vunpack.c.l.b16 %v270
      %v563 = vunpack.c.l.b16 %v271
      %v564 = vunpack.c.l.b16 %v272
      %v565 = vunpack.c.l.b16 %v273
      %v566 = vunpack.c.l.b16 %v274
      %v567 = vpack.c.b16 %v552, %v551
      %v568 = vpack.c.b16 %v554, %v553
      %v569 = vpack.c.b16 %v556, %v555
      %v570 = vpack.c.b16 %v558, %v557
      %v571 = vpack.c.b16 %v560, %v559
      %v572 = vpack.c.b16 %v562, %v561
      %v573 = vpack.c.b16 %v564, %v563
      %v574 = vpack.c.b16 %v566, %v565
      %583 = vmatprep.subr.bf16.mxu0 0
      %584 = vmatpush1.bf16.msra.mxu0 %v567
      %585 = vmatprep.subr.bf16.mxu0 0
      %586 = vmatpush1.bf16.msra.mxu0 %v568
      %587 = vmatprep.subr.bf16.mxu0 0
      %588 = vmatpush1.bf16.msra.mxu0 %v569
      %589 = vmatprep.subr.bf16.mxu0 0
      %590 = vmatpush1.bf16.msra.mxu0 %v570
      %591 = vmatprep.subr.bf16.mxu0 0
      %592 = vmatpush1.bf16.msra.mxu0 %v571
      %593 = vmatprep.subr.bf16.mxu0 0
      %594 = vmatpush1.bf16.msra.mxu0 %v572
      %595 = vmatprep.subr.bf16.mxu0 0
      %596 = vmatpush1.bf16.msra.mxu0 %v573
      %597 = vmatprep.subr.bf16.mxu0 0
      %598 = vmatpush1.bf16.msra.mxu0 %v574
      %599 = vmatprep.subr.bf16.mxu0 0
      %600 = vmatpush1.bf16.msra.mxu0 0
      %601 = vmatprep.subr.bf16.mxu0 0
      %602 = vmatpush1.bf16.msra.mxu0 0
      %603 = vmatprep.subr.bf16.mxu0 0
      %604 = vmatpush1.bf16.msra.mxu0 0
      %605 = vmatprep.subr.bf16.mxu0 0
      %606 = vmatpush1.bf16.msra.mxu0 0
      %607 = vmatprep.subr.bf16.mxu0 0
      %608 = vmatpush1.bf16.msra.mxu0 0
      %609 = vmatprep.subr.bf16.mxu0 0
      %610 = vmatpush1.bf16.msra.mxu0 0
      %611 = vmatprep.subr.bf16.mxu0 0
      %612 = vmatpush1.bf16.msra.mxu0 0
      %613 = vmatprep.subr.bf16.mxu0 0
      %614 = vmatpush1.bf16.msra.mxu0 0
      %615 = vmatprep.mubr.bf16.mxu0 0
      %616 = vmatmul.mubr.bf16.gmra.mrb[0].mxu0 %v319
      %v617 = vpop.f32.mrb[0].mxu0
      %v618 = vadd.f32 %v472, %v617
      %v619 = vpop.f32.mrb[0].mxu0
      %v620 = vpop.f32.mrb[0].mxu0
      %v621 = vadd.f32 %v475, %v620
      %v622 = vpop.f32.mrb[0].mxu0
      %623 = vmatprep.mubr.bf16.mxu0 0
      %624 = vmatmul.mubr.bf16.gmra.mrb[0].mxu0 %v320
      %v625 = vpop.f32.mrb[0].mxu0
      %v626 = vadd.f32 %v480, %v625
      %v627 = vpop.f32.mrb[0].mxu0
      %v628 = vpop.f32.mrb[0].mxu0
      %v629 = vadd.f32 %v483, %v628
      %v630 = vpop.f32.mrb[0].mxu0
      %631 = vmatprep.mubr.bf16.mxu0 0
      %632 = vmatmul.mubr.bf16.gmra.mrb[0].mxu0 %v321
      %v633 = vpop.f32.mrb[0].mxu0
      %v634 = vadd.f32 %v488, %v633
      %v635 = vpop.f32.mrb[0].mxu0
      %v636 = vpop.f32.mrb[0].mxu0
      %v637 = vadd.f32 %v491, %v636
      %v638 = vpop.f32.mrb[0].mxu0
      %639 = vmatprep.mubr.bf16.mxu0 0
      %640 = vmatmul.mubr.bf16.gmra.mrb[0].mxu0 %v322
      %v641 = vpop.f32.mrb[0].mxu0
      %v642 = vadd.f32 %v496, %v641
      %v643 = vpop.f32.mrb[0].mxu0
      %v644 = vpop.f32.mrb[0].mxu0
      %v645 = vadd.f32 %v499, %v644
      %v646 = vpop.f32.mrb[0].mxu0
      %647 = vmatprep.mubr.bf16.mxu0 0
      %648 = vmatmul.mubr.bf16.gmra.mrb[0].mxu0 %v323
      %v649 = vpop.f32.mrb[0].mxu0
      %v650 = vadd.f32 %v504, %v649
      %v651 = vpop.f32.mrb[0].mxu0
      %v652 = vpop.f32.mrb[0].mxu0
      %v653 = vadd.f32 %v507, %v652
      %v654 = vpop.f32.mrb[0].mxu0
      %655 = vmatprep.mubr.bf16.mxu0 0
      %656 = vmatmul.mubr.bf16.gmra.mrb[0].mxu0 %v324
      %v657 = vpop.f32.mrb[0].mxu0
      %v658 = vadd.f32 %v512, %v657
      %v659 = vpop.f32.mrb[0].mxu0
      %v660 = vpop.f32.mrb[0].mxu0
      %v661 = vadd.f32 %v515, %v660
      %v662 = vpop.f32.mrb[0].mxu0
      %663 = vmatprep.mubr.bf16.mxu0 0
      %664 = vmatmul.mubr.bf16.gmra.mrb[0].mxu0 %v527
      %v665 = vpop.f32.mrb[0].mxu0
      %v666 = vadd.f32 %v520, %v665
      %v667 = vpop.f32.mrb[0].mxu0
      %v668 = vpop.f32.mrb[0].mxu0
      %v669 = vpop.f32.mrb[0].mxu0
      %670 = vdwg.mxu0
      %v671 = vld [vmem:[%s234] sm:$0xe]
      %s672 = scalar_lea.vmem %s1, 128
      %v673 = vld [vmem:[%s672] sm:$0xf]
      %v674 = vld [vmem:[%s672 + $0x4] sm:$0xf]
      %v675 = vld [vmem:[%s672 + $0x8] sm:$0xf]
      %v676 = vld [vmem:[%s672 + $0xc] sm:$0xf]
      %v677 = vld [vmem:[%s672 + $0x10] sm:$0xf]
      %v678 = vld [vmem:[%s672 + $0x14] sm:$0xf]
      %v679 = vld [vmem:[%s672 + $0x18] sm:$0xf]
      %v680 = vld [vmem:[%s672 + $0x1c] sm:$0xf]
      %v681 = vld [vmem:[%s672 + $0x20] sm:$0xf]
      %v682 = vld [vmem:[%s672 + $0x24] sm:$0xf]
      %v683 = vld [vmem:[%s672 + $0x28] sm:$0xf]
      %v684 = vld [vmem:[%s672 + $0x2c] sm:$0xf]
      %v685 = vld [vmem:[%s672 + $0x30] sm:$0xf]
      %v686 = vld [vmem:[%s672 + $0x34] sm:$0xf]
      %v687 = vld [vmem:[%s672 + $0x38] sm:$0xf]
      %v688 = vld [vmem:[%s672 + $0x3c] sm:$0xf]
      %v690 = vunpack.c.l.b16 %v671
      %v691 = vpack.c.b16 %v307, %v690
      %vm692 = vcmask 1046528
      %v693 = vrot.slane %v691, 1
      %v694 = vrot.slane %v320, 1
      %v695 = vsel %vm692, %v693, %v694
      %v696 = vrot.slane %v321, 1
      %v697 = vsel %vm692, %v694, %v696
      %v698 = vrot.slane %v322, 1
      %v699 = vsel %vm692, %v696, %v698
      %v700 = vrot.slane %v323, 1
      %v701 = vsel %vm692, %v698, %v700
      %v702 = vrot.slane %v324, 1
      %v703 = vsel %vm692, %v700, %v702
      %v704 = vrot.slane %v325, 1
      %v705 = vsel %vm692, %v702, %v704
      %v729 = vunpack.c.l.b16 %v673
      %v730 = vunpack.c.l.b16 %v674
      %v731 = vunpack.c.l.b16 %v675
      %v732 = vunpack.c.l.b16 %v676
      %v733 = vunpack.c.l.b16 %v677
      %v734 = vunpack.c.l.b16 %v678
      %v735 = vunpack.c.l.b16 %v679
      %v736 = vunpack.c.l.b16 %v680
      %v737 = vunpack.c.l.b16 %v681
      %v738 = vunpack.c.l.b16 %v682
      %v739 = vunpack.c.l.b16 %v683
      %v740 = vunpack.c.l.b16 %v684
      %v741 = vunpack.c.l.b16 %v685
      %v742 = vunpack.c.l.b16 %v686
      %v743 = vunpack.c.l.b16 %v687
      %v744 = vunpack.c.l.b16 %v688
      %v745 = vpack.c.b16 %v730, %v729
      %v746 = vpack.c.b16 %v732, %v731
      %v747 = vpack.c.b16 %v734, %v733
      %v748 = vpack.c.b16 %v736, %v735
      %v749 = vpack.c.b16 %v738, %v737
      %v750 = vpack.c.b16 %v740, %v739
      %v751 = vpack.c.b16 %v742, %v741
      %v752 = vpack.c.b16 %v744, %v743
      %761 = vmatprep.subr.bf16.mxu0 0
      %762 = vmatpush1.bf16.msra.mxu0 %v745
      %763 = vmatprep.subr.bf16.mxu0 0
      %764 = vmatpush1.bf16.msra.mxu0 %v746
      %765 = vmatprep.subr.bf16.mxu0 0
      %766 = vmatpush1.bf16.msra.mxu0 %v747
      %767 = vmatprep.subr.bf16.mxu0 0
      %768 = vmatpush1.bf16.msra.mxu0 %v748
      %769 = vmatprep.subr.bf16.mxu0 0
      %770 = vmatpush1.bf16.msra.mxu0 %v749
      %771 = vmatprep.subr.bf16.mxu0 0
      %772 = vmatpush1.bf16.msra.mxu0 %v750
      %773 = vmatprep.subr.bf16.mxu0 0
      %774 = vmatpush1.bf16.msra.mxu0 %v751
      %775 = vmatprep.subr.bf16.mxu0 0
      %776 = vmatpush1.bf16.msra.mxu0 %v752
      %777 = vmatprep.subr.bf16.mxu0 0
      %778 = vmatpush1.bf16.msra.mxu0 0
      %779 = vmatprep.subr.bf16.mxu0 0
      %780 = vmatpush1.bf16.msra.mxu0 0
      %781 = vmatprep.subr.bf16.mxu0 0
      %782 = vmatpush1.bf16.msra.mxu0 0
      %783 = vmatprep.subr.bf16.mxu0 0
      %784 = vmatpush1.bf16.msra.mxu0 0
      %785 = vmatprep.subr.bf16.mxu0 0
      %786 = vmatpush1.bf16.msra.mxu0 0
      %787 = vmatprep.subr.bf16.mxu0 0
      %788 = vmatpush1.bf16.msra.mxu0 0
      %789 = vmatprep.subr.bf16.mxu0 0
      %790 = vmatpush1.bf16.msra.mxu0 0
      %791 = vmatprep.subr.bf16.mxu0 0
      %792 = vmatpush1.bf16.msra.mxu0 0
      %793 = vmatprep.mubr.bf16.mxu0 0
      %794 = vmatmul.mubr.bf16.gmra.mrb[0].mxu0 %v695
      %v795 = vpop.f32.mrb[0].mxu0
      %v796 = vadd.f32 0.0, %v795
      %v797 = vpop.f32.mrb[0].mxu0
      %v798 = vpop.f32.mrb[0].mxu0
      %v799 = vadd.f32 0.0, %v798
      %v800 = vpop.f32.mrb[0].mxu0
      %801 = vmatprep.mubr.bf16.mxu0 0
      %802 = vmatmul.mubr.bf16.gmra.mrb[0].mxu0 %v697
      %v803 = vpop.f32.mrb[0].mxu0
      %v804 = vadd.f32 0.0, %v803
      %v805 = vpop.f32.mrb[0].mxu0
      %v806 = vpop.f32.mrb[0].mxu0
      %v807 = vadd.f32 0.0, %v806
      %v808 = vpop.f32.mrb[0].mxu0
      %809 = vmatprep.mubr.bf16.mxu0 0
      %810 = vmatmul.mubr.bf16.gmra.mrb[0].mxu0 %v699
      %v811 = vpop.f32.mrb[0].mxu0
      %v812 = vadd.f32 0.0, %v811
      %v813 = vpop.f32.mrb[0].mxu0
      %v814 = vpop.f32.mrb[0].mxu0
      %v815 = vadd.f32 0.0, %v814
      %v816 = vpop.f32.mrb[0].mxu0
      %817 = vmatprep.mubr.bf16.mxu0 0
      %818 = vmatmul.mubr.bf16.gmra.mrb[0].mxu0 %v701
      %v819 = vpop.f32.mrb[0].mxu0
      %v820 = vadd.f32 0.0, %v819
      %v821 = vpop.f32.mrb[0].mxu0
      %v822 = vpop.f32.mrb[0].mxu0
      %v823 = vadd.f32 0.0, %v822
      %v824 = vpop.f32.mrb[0].mxu0
      %825 = vmatprep.mubr.bf16.mxu0 0
      %826 = vmatmul.mubr.bf16.gmra.mrb[0].mxu0 %v703
      %v827 = vpop.f32.mrb[0].mxu0
      %v828 = vadd.f32 0.0, %v827
      %v829 = vpop.f32.mrb[0].mxu0
      %v830 = vpop.f32.mrb[0].mxu0
      %v831 = vadd.f32 0.0, %v830
      %v832 = vpop.f32.mrb[0].mxu0
      %833 = vmatprep.mubr.bf16.mxu0 0
      %834 = vmatmul.mubr.bf16.gmra.mrb[0].mxu0 %v705
      %v835 = vpop.f32.mrb[0].mxu0
      %v836 = vadd.f32 0.0, %v835
      %v837 = vpop.f32.mrb[0].mxu0
      %v838 = vpop.f32.mrb[0].mxu0
      %v839 = vadd.f32 0.0, %v838
      %v840 = vpop.f32.mrb[0].mxu0
      %841 = vmatprep.mubr.bf16.mxu0 0
      %842 = vmatmul.mubr.bf16.gmra.mrb[0].mxu0 %v704
      %v843 = vpop.f32.mrb[0].mxu0
      %v844 = vadd.f32 0.0, %v843
      %v845 = vpop.f32.mrb[0].mxu0
      %v846 = vpop.f32.mrb[0].mxu0
      %v847 = vpop.f32.mrb[0].mxu0
      %848 = vdwg.mxu0
      %v849 = vadd.f32 %v618, %v796
      %v850 = vadd.f32 %v621, %v799
      %v851 = vadd.f32 %v626, %v804
      %v852 = vadd.f32 %v629, %v807
      %v853 = vadd.f32 %v634, %v812
      %v854 = vadd.f32 %v637, %v815
      %v855 = vadd.f32 %v642, %v820
      %v856 = vadd.f32 %v645, %v823
      %v857 = vadd.f32 %v650, %v828
      %v858 = vadd.f32 %v653, %v831
      %v859 = vadd.f32 %v658, %v836
      %v860 = vadd.f32 %v661, %v839
      %v861 = vadd.f32 %v666, %v844
      %v862 = vld [vmem:[%s234 + $0x4] sm:$0xe]
      %v863 = vld [vmem:[%s234 + $0x8] sm:$0xf]
      %v864 = vld [vmem:[%s234 + $0xc] sm:$0xf]
      %v865 = vld [vmem:[%s234 + $0x10] sm:$0xf]
      %v866 = vld [vmem:[%s234 + $0x14] sm:$0xf]
      %v867 = vld [vmem:[%s234 + $0x18] sm:$0xf]
      %v868 = vld [vmem:[%s234 + $0x1c] sm:$0xf]
      %v869 = vld [vmem:[%s234 + $0x20] sm:$0xf]
      %v870 = vld [vmem:[%s234 + $0x24] sm:$0xf]
      %v871 = vld [vmem:[%s234 + $0x28] sm:$0xf]
      %v872 = vld [vmem:[%s234 + $0x2c] sm:$0xf]
      %v873 = vld [vmem:[%s234 + $0x30] sm:$0xf]
      %v874 = vld [vmem:[%s234 + $0x34] sm:$0x7]
      %s875 = scalar_lea.vmem %s1, 192
      %v876 = vld [vmem:[%s875] sm:$0xf]
      %v877 = vld [vmem:[%s875 + $0x4] sm:$0xf]
      %v878 = vld [vmem:[%s875 + $0x8] sm:$0xf]
      %v879 = vld [vmem:[%s875 + $0xc] sm:$0xf]
      %v880 = vld [vmem:[%s875 + $0x10] sm:$0xf]
      %v881 = vld [vmem:[%s875 + $0x14] sm:$0xf]
      %v882 = vld [vmem:[%s875 + $0x18] sm:$0xf]
      %v883 = vld [vmem:[%s875 + $0x1c] sm:$0xf]
      %v884 = vld [vmem:[%s875 + $0x20] sm:$0xf]
      %v885 = vld [vmem:[%s875 + $0x24] sm:$0xf]
      %v886 = vld [vmem:[%s875 + $0x28] sm:$0xf]
      %v887 = vld [vmem:[%s875 + $0x2c] sm:$0xf]
      %v888 = vld [vmem:[%s875 + $0x30] sm:$0xf]
      %v889 = vld [vmem:[%s875 + $0x34] sm:$0xf]
      %v890 = vld [vmem:[%s875 + $0x38] sm:$0xf]
      %v891 = vld [vmem:[%s875 + $0x3c] sm:$0xf]
      %v905 = vunpack.c.l.b16 %v862
      %v906 = vunpack.c.l.b16 %v863
      %v907 = vunpack.c.l.b16 %v864
      %v908 = vunpack.c.l.b16 %v865
      %v909 = vunpack.c.l.b16 %v866
      %v910 = vunpack.c.l.b16 %v867
      %v911 = vunpack.c.l.b16 %v868
      %v912 = vunpack.c.l.b16 %v869
      %v913 = vunpack.c.l.b16 %v870
      %v914 = vunpack.c.l.b16 %v871
      %v915 = vunpack.c.l.b16 %v872
      %v916 = vunpack.c.l.b16 %v873
      %v917 = vunpack.c.l.b16 %v874
      %v918 = vpack.c.b16 %v906, %v905
      %v919 = vpack.c.b16 %v908, %v907
      %v920 = vpack.c.b16 %v910, %v909
      %v921 = vpack.c.b16 %v912, %v911
      %v922 = vpack.c.b16 %v914, %v913
      %v923 = vpack.c.b16 %v916, %v915
      %v924 = vpack.c.b16 %v917, %v917
      %v925 = vrot.slane %v918, 1
      %v926 = vrot.slane %v919, 1
      %v927 = vsel %vm692, %v925, %v926
      %v928 = vrot.slane %v920, 1
      %v929 = vsel %vm692, %v926, %v928
      %v930 = vrot.slane %v921, 1
      %v931 = vsel %vm692, %v928, %v930
      %v932 = vrot.slane %v922, 1
      %v933 = vsel %vm692, %v930, %v932
      %v934 = vrot.slane %v923, 1
      %v935 = vsel %vm692, %v932, %v934
      %v936 = vrot.slane %v924, 1
      %v937 = vsel %vm692, %v934, %v936
      %v961 = vunpack.c.l.b16 %v876
      %v962 = vunpack.c.l.b16 %v877
      %v963 = vunpack.c.l.b16 %v878
      %v964 = vunpack.c.l.b16 %v879
      %v965 = vunpack.c.l.b16 %v880
      %v966 = vunpack.c.l.b16 %v881
      %v967 = vunpack.c.l.b16 %v882
      %v968 = vunpack.c.l.b16 %v883
      %v969 = vunpack.c.l.b16 %v884
      %v970 = vunpack.c.l.b16 %v885
      %v971 = vunpack.c.l.b16 %v886
      %v972 = vunpack.c.l.b16 %v887
      %v973 = vunpack.c.l.b16 %v888
      %v974 = vunpack.c.l.b16 %v889
      %v975 = vunpack.c.l.b16 %v890
      %v976 = vunpack.c.l.b16 %v891
      %v977 = vpack.c.b16 %v962, %v961
      %v978 = vpack.c.b16 %v964, %v963
      %v979 = vpack.c.b16 %v966, %v965
      %v980 = vpack.c.b16 %v968, %v967
      %v981 = vpack.c.b16 %v970, %v969
      %v982 = vpack.c.b16 %v972, %v971
      %v983 = vpack.c.b16 %v974, %v973
      %v984 = vpack.c.b16 %v976, %v975
      %993 = vmatprep.subr.bf16.mxu0 0
      %994 = vmatpush1.bf16.msra.mxu0 %v977
      %995 = vmatprep.subr.bf16.mxu0 0
      %996 = vmatpush1.bf16.msra.mxu0 %v978
      %997 = vmatprep.subr.bf16.mxu0 0
      %998 = vmatpush1.bf16.msra.mxu0 %v979
      %999 = vmatprep.subr.bf16.mxu0 0
      %1000 = vmatpush1.bf16.msra.mxu0 %v980
      %1001 = vmatprep.subr.bf16.mxu0 0
      %1002 = vmatpush1.bf16.msra.mxu0 %v981
      %1003 = vmatprep.subr.bf16.mxu0 0
      %1004 = vmatpush1.bf16.msra.mxu0 %v982
      %1005 = vmatprep.subr.bf16.mxu0 0
      %1006 = vmatpush1.bf16.msra.mxu0 %v983
      %1007 = vmatprep.subr.bf16.mxu0 0
      %1008 = vmatpush1.bf16.msra.mxu0 %v984
      %1009 = vmatprep.subr.bf16.mxu0 0
      %1010 = vmatpush1.bf16.msra.mxu0 0
      %1011 = vmatprep.subr.bf16.mxu0 0
      %1012 = vmatpush1.bf16.msra.mxu0 0
      %1013 = vmatprep.subr.bf16.mxu0 0
      %1014 = vmatpush1.bf16.msra.mxu0 0
      %1015 = vmatprep.subr.bf16.mxu0 0
      %1016 = vmatpush1.bf16.msra.mxu0 0
      %1017 = vmatprep.subr.bf16.mxu0 0
      %1018 = vmatpush1.bf16.msra.mxu0 0
      %1019 = vmatprep.subr.bf16.mxu0 0
      %1020 = vmatpush1.bf16.msra.mxu0 0
      %1021 = vmatprep.subr.bf16.mxu0 0
      %1022 = vmatpush1.bf16.msra.mxu0 0
      %1023 = vmatprep.subr.bf16.mxu0 0
      %1024 = vmatpush1.bf16.msra.mxu0 0
      %1025 = vmatprep.mubr.bf16.mxu0 0
      %1026 = vmatmul.mubr.bf16.gmra.mrb[0].mxu0 %v927
      %v1027 = vpop.f32.mrb[0].mxu0
      %v1028 = vadd.f32 0.0, %v1027
      %v1029 = vpop.f32.mrb[0].mxu0
      %v1030 = vpop.f32.mrb[0].mxu0
      %v1031 = vadd.f32 0.0, %v1030
      %v1032 = vpop.f32.mrb[0].mxu0
      %1033 = vmatprep.mubr.bf16.mxu0 0
      %1034 = vmatmul.mubr.bf16.gmra.mrb[0].mxu0 %v929
      %v1035 = vpop.f32.mrb[0].mxu0
      %v1036 = vadd.f32 0.0, %v1035
      %v1037 = vpop.f32.mrb[0].mxu0
      %v1038 = vpop.f32.mrb[0].mxu0
      %v1039 = vadd.f32 0.0, %v1038
      %v1040 = vpop.f32.mrb[0].mxu0
      %1041 = vmatprep.mubr.bf16.mxu0 0
      %1042 = vmatmul.mubr.bf16.gmra.mrb[0].mxu0 %v931
      %v1043 = vpop.f32.mrb[0].mxu0
      %v1044 = vadd.f32 0.0, %v1043
      %v1045 = vpop.f32.mrb[0].mxu0
      %v1046 = vpop.f32.mrb[0].mxu0
      %v1047 = vadd.f32 0.0, %v1046
      %v1048 = vpop.f32.mrb[0].mxu0
      %1049 = vmatprep.mubr.bf16.mxu0 0
      %1050 = vmatmul.mubr.bf16.gmra.mrb[0].mxu0 %v933
      %v1051 = vpop.f32.mrb[0].mxu0
      %v1052 = vadd.f32 0.0, %v1051
      %v1053 = vpop.f32.mrb[0].mxu0
      %v1054 = vpop.f32.mrb[0].mxu0
      %v1055 = vadd.f32 0.0, %v1054
      %v1056 = vpop.f32.mrb[0].mxu0
      %1057 = vmatprep.mubr.bf16.mxu0 0
      %1058 = vmatmul.mubr.bf16.gmra.mrb[0].mxu0 %v935
      %v1059 = vpop.f32.mrb[0].mxu0
      %v1060 = vadd.f32 0.0, %v1059
      %v1061 = vpop.f32.mrb[0].mxu0
      %v1062 = vpop.f32.mrb[0].mxu0
      %v1063 = vadd.f32 0.0, %v1062
      %v1064 = vpop.f32.mrb[0].mxu0
      %1065 = vmatprep.mubr.bf16.mxu0 0
      %1066 = vmatmul.mubr.bf16.gmra.mrb[0].mxu0 %v937
      %v1067 = vpop.f32.mrb[0].mxu0
      %v1068 = vadd.f32 0.0, %v1067
      %v1069 = vpop.f32.mrb[0].mxu0
      %v1070 = vpop.f32.mrb[0].mxu0
      %v1071 = vadd.f32 0.0, %v1070
      %v1072 = vpop.f32.mrb[0].mxu0
      %1073 = vmatprep.mubr.bf16.mxu0 0
      %1074 = vmatmul.mubr.bf16.gmra.mrb[0].mxu0 %v936
      %v1075 = vpop.f32.mrb[0].mxu0
      %v1076 = vadd.f32 0.0, %v1075
      %v1077 = vpop.f32.mrb[0].mxu0
      %v1078 = vpop.f32.mrb[0].mxu0
      %v1079 = vpop.f32.mrb[0].mxu0
      %1080 = vdwg.mxu0
      %v1081 = vadd.f32 %v849, %v1028
      %v1082 = vadd.f32 %v850, %v1031
      %v1083 = vadd.f32 %v851, %v1036
      %v1084 = vadd.f32 %v852, %v1039
      %v1085 = vadd.f32 %v853, %v1044
      %v1086 = vadd.f32 %v854, %v1047
      %v1087 = vadd.f32 %v855, %v1052
      %v1088 = vadd.f32 %v856, %v1055
      %v1089 = vadd.f32 %v857, %v1060
      %v1090 = vadd.f32 %v858, %v1063
      %v1091 = vadd.f32 %v859, %v1068
      %v1092 = vadd.f32 %v860, %v1071
      %v1093 = vadd.f32 %v861, %v1076
      %v1094 = vld [vmem:[%s234 + $0x34] sm:$0xf]
      %s1095 = scalar_lea.vmem %s1, 256
      %v1096 = vld [vmem:[%s1095] sm:$0xf]
      %v1097 = vld [vmem:[%s1095 + $0x4] sm:$0xf]
      %v1098 = vld [vmem:[%s1095 + $0x8] sm:$0xf]
      %v1099 = vld [vmem:[%s1095 + $0xc] sm:$0xf]
      %v1100 = vld [vmem:[%s1095 + $0x10] sm:$0xf]
      %v1101 = vld [vmem:[%s1095 + $0x14] sm:$0xf]
      %v1102 = vld [vmem:[%s1095 + $0x18] sm:$0xf]
      %v1103 = vld [vmem:[%s1095 + $0x1c] sm:$0xf]
      %v1104 = vld [vmem:[%s1095 + $0x20] sm:$0xf]
      %v1105 = vld [vmem:[%s1095 + $0x24] sm:$0xf]
      %v1106 = vld [vmem:[%s1095 + $0x28] sm:$0xf]
      %v1107 = vld [vmem:[%s1095 + $0x2c] sm:$0xf]
      %v1108 = vld [vmem:[%s1095 + $0x30] sm:$0xf]
      %v1109 = vld [vmem:[%s1095 + $0x34] sm:$0xf]
      %v1110 = vld [vmem:[%s1095 + $0x38] sm:$0xf]
      %v1111 = vld [vmem:[%s1095 + $0x3c] sm:$0xf]
      %v1113 = vunpack.c.l.b16 %v1094
      %v1114 = vpack.c.b16 %v1113, %v1113
      %vm1115 = vsmask.f32 6400
      %v1117 = vshrl.u32 %v918, 16
      %v1119 = vrot.slane %v1117, 1
      %v1120 = vshll.u32 %v918, 16
      %v1122 = vrot.slane %v1120, 2
      %v1123 = vor.u32 %v1119, %v1122
      %v1125 = vshrl.u32 %v919, 16
      %v1127 = vrot.slane %v1125, 1
      %v1128 = vshll.u32 %v919, 16
      %v1130 = vrot.slane %v1128, 2
      %v1131 = vor.u32 %v1127, %v1130
      %v1132 = vsel %vm1115, %v1123, %v1131
      %v1134 = vshrl.u32 %v920, 16
      %v1136 = vrot.slane %v1134, 1
      %v1137 = vshll.u32 %v920, 16
      %v1139 = vrot.slane %v1137, 2
      %v1140 = vor.u32 %v1136, %v1139
      %v1141 = vsel %vm1115, %v1131, %v1140
      %v1143 = vshrl.u32 %v921, 16
      %v1145 = vrot.slane %v1143, 1
      %v1146 = vshll.u32 %v921, 16
      %v1148 = vrot.slane %v1146, 2
      %v1149 = vor.u32 %v1145, %v1148
      %v1150 = vsel %vm1115, %v1140, %v1149
      %v1152 = vshrl.u32 %v922, 16
      %v1154 = vrot.slane %v1152, 1
      %v1155 = vshll.u32 %v922, 16
      %v1157 = vrot.slane %v1155, 2
      %v1158 = vor.u32 %v1154, %v1157
      %v1159 = vsel %vm1115, %v1149, %v1158
      %v1161 = vshrl.u32 %v923, 16
      %v1163 = vrot.slane %v1161, 1
      %v1164 = vshll.u32 %v923, 16
      %v1166 = vrot.slane %v1164, 2
      %v1167 = vor.u32 %v1163, %v1166
      %v1168 = vsel %vm1115, %v1158, %v1167
      %v1170 = vshrl.u32 %v1114, 16
      %v1172 = vrot.slane %v1170, 1
      %v1173 = vshll.u32 %v1114, 16
      %v1175 = vrot.slane %v1173, 2
      %v1176 = vor.u32 %v1172, %v1175
      %v1177 = vsel %vm1115, %v1167, %v1176
      %v1201 = vunpack.c.l.b16 %v1096
      %v1202 = vunpack.c.l.b16 %v1097
      %v1203 = vunpack.c.l.b16 %v1098
      %v1204 = vunpack.c.l.b16 %v1099
      %v1205 = vunpack.c.l.b16 %v1100
      %v1206 = vunpack.c.l.b16 %v1101
      %v1207 = vunpack.c.l.b16 %v1102
      %v1208 = vunpack.c.l.b16 %v1103
      %v1209 = vunpack.c.l.b16 %v1104
      %v1210 = vunpack.c.l.b16 %v1105
      %v1211 = vunpack.c.l.b16 %v1106
      %v1212 = vunpack.c.l.b16 %v1107
      %v1213 = vunpack.c.l.b16 %v1108
      %v1214 = vunpack.c.l.b16 %v1109
      %v1215 = vunpack.c.l.b16 %v1110
      %v1216 = vunpack.c.l.b16 %v1111
      %v1217 = vpack.c.b16 %v1202, %v1201
      %v1218 = vpack.c.b16 %v1204, %v1203
      %v1219 = vpack.c.b16 %v1206, %v1205
      %v1220 = vpack.c.b16 %v1208, %v1207
      %v1221 = vpack.c.b16 %v1210, %v1209
      %v1222 = vpack.c.b16 %v1212, %v1211
      %v1223 = vpack.c.b16 %v1214, %v1213
      %v1224 = vpack.c.b16 %v1216, %v1215
      %1233 = vmatprep.subr.bf16.mxu0 0
      %1234 = vmatpush1.bf16.msra.mxu0 %v1217
      %1235 = vmatprep.subr.bf16.mxu0 0
      %1236 = vmatpush1.bf16.msra.mxu0 %v1218
      %1237 = vmatprep.subr.bf16.mxu0 0
      %1238 = vmatpush1.bf16.msra.mxu0 %v1219
      %1239 = vmatprep.subr.bf16.mxu0 0
      %1240 = vmatpush1.bf16.msra.mxu0 %v1220
      %1241 = vmatprep.subr.bf16.mxu0 0
      %1242 = vmatpush1.bf16.msra.mxu0 %v1221
      %1243 = vmatprep.subr.bf16.mxu0 0
      %1244 = vmatpush1.bf16.msra.mxu0 %v1222
      %1245 = vmatprep.subr.bf16.mxu0 0
      %1246 = vmatpush1.bf16.msra.mxu0 %v1223
      %1247 = vmatprep.subr.bf16.mxu0 0
      %1248 = vmatpush1.bf16.msra.mxu0 %v1224
      %1249 = vmatprep.subr.bf16.mxu0 0
      %1250 = vmatpush1.bf16.msra.mxu0 0
      %1251 = vmatprep.subr.bf16.mxu0 0
      %1252 = vmatpush1.bf16.msra.mxu0 0
      %1253 = vmatprep.subr.bf16.mxu0 0
      %1254 = vmatpush1.bf16.msra.mxu0 0
      %1255 = vmatprep.subr.bf16.mxu0 0
      %1256 = vmatpush1.bf16.msra.mxu0 0
      %1257 = vmatprep.subr.bf16.mxu0 0
      %1258 = vmatpush1.bf16.msra.mxu0 0
      %1259 = vmatprep.subr.bf16.mxu0 0
      %1260 = vmatpush1.bf16.msra.mxu0 0
      %1261 = vmatprep.subr.bf16.mxu0 0
      %1262 = vmatpush1.bf16.msra.mxu0 0
      %1263 = vmatprep.subr.bf16.mxu0 0
      %1264 = vmatpush1.bf16.msra.mxu0 0
      %1265 = vmatprep.mubr.bf16.mxu0 0
      %1266 = vmatmul.mubr.bf16.gmra.mrb[0].mxu0 %v1132
      %v1267 = vpop.f32.mrb[0].mxu0
      %v1268 = vadd.f32 0.0, %v1267
      %v1269 = vpop.f32.mrb[0].mxu0
      %v1270 = vpop.f32.mrb[0].mxu0
      %v1271 = vadd.f32 0.0, %v1270
      %v1272 = vpop.f32.mrb[0].mxu0
      %1273 = vmatprep.mubr.bf16.mxu0 0
      %1274 = vmatmul.mubr.bf16.gmra.mrb[0].mxu0 %v1141
      %v1275 = vpop.f32.mrb[0].mxu0
      %v1276 = vadd.f32 0.0, %v1275
      %v1277 = vpop.f32.mrb[0].mxu0
      %v1278 = vpop.f32.mrb[0].mxu0
      %v1279 = vadd.f32 0.0, %v1278
      %v1280 = vpop.f32.mrb[0].mxu0
      %1281 = vmatprep.mubr.bf16.mxu0 0
      %1282 = vmatmul.mubr.bf16.gmra.mrb[0].mxu0 %v1150
      %v1283 = vpop.f32.mrb[0].mxu0
      %v1284 = vadd.f32 0.0, %v1283
      %v1285 = vpop.f32.mrb[0].mxu0
      %v1286 = vpop.f32.mrb[0].mxu0
      %v1287 = vadd.f32 0.0, %v1286
      %v1288 = vpop.f32.mrb[0].mxu0
      %1289 = vmatprep.mubr.bf16.mxu0 0
      %1290 = vmatmul.mubr.bf16.gmra.mrb[0].mxu0 %v1159
      %v1291 = vpop.f32.mrb[0].mxu0
      %v1292 = vadd.f32 0.0, %v1291
      %v1293 = vpop.f32.mrb[0].mxu0
      %v1294 = vpop.f32.mrb[0].mxu0
      %v1295 = vadd.f32 0.0, %v1294
      %v1296 = vpop.f32.mrb[0].mxu0
      %1297 = vmatprep.mubr.bf16.mxu0 0
      %1298 = vmatmul.mubr.bf16.gmra.mrb[0].mxu0 %v1168
      %v1299 = vpop.f32.mrb[0].mxu0
      %v1300 = vadd.f32 0.0, %v1299
      %v1301 = vpop.f32.mrb[0].mxu0
      %v1302 = vpop.f32.mrb[0].mxu0
      %v1303 = vadd.f32 0.0, %v1302
      %v1304 = vpop.f32.mrb[0].mxu0
      %1305 = vmatprep.mubr.bf16.mxu0 0
      %1306 = vmatmul.mubr.bf16.gmra.mrb[0].mxu0 %v1177
      %v1307 = vpop.f32.mrb[0].mxu0
      %v1308 = vadd.f32 0.0, %v1307
      %v1309 = vpop.f32.mrb[0].mxu0
      %v1310 = vpop.f32.mrb[0].mxu0
      %v1311 = vadd.f32 0.0, %v1310
      %v1312 = vpop.f32.mrb[0].mxu0
      %1313 = vmatprep.mubr.bf16.mxu0 0
      %1314 = vmatmul.mubr.bf16.gmra.mrb[0].mxu0 %v1176
      %v1315 = vpop.f32.mrb[0].mxu0
      %v1316 = vadd.f32 0.0, %v1315
      %v1317 = vpop.f32.mrb[0].mxu0
      %v1318 = vpop.f32.mrb[0].mxu0
      %v1319 = vpop.f32.mrb[0].mxu0
      %1320 = vdwg.mxu0
      %v1321 = vadd.f32 %v1081, %v1268
      %v1322 = vadd.f32 %v1082, %v1271
      %v1323 = vadd.f32 %v1083, %v1276
      %v1324 = vadd.f32 %v1084, %v1279
      %v1325 = vadd.f32 %v1085, %v1284
      %v1326 = vadd.f32 %v1086, %v1287
      %v1327 = vadd.f32 %v1087, %v1292
      %v1328 = vadd.f32 %v1088, %v1295
      %v1329 = vadd.f32 %v1089, %v1300
      %v1330 = vadd.f32 %v1090, %v1303
      %v1331 = vadd.f32 %v1091, %v1308
      %v1332 = vadd.f32 %v1092, %v1311
      %v1333 = vadd.f32 %v1093, %v1316
      %v1334 = vld [vmem:[%s234 + $0x4] sm:$0xc]
      %s1335 = scalar_lea.vmem %s1, 320
      %v1336 = vld [vmem:[%s1335] sm:$0xf]
      %v1337 = vld [vmem:[%s1335 + $0x4] sm:$0xf]
      %v1338 = vld [vmem:[%s1335 + $0x8] sm:$0xf]
      %v1339 = vld [vmem:[%s1335 + $0xc] sm:$0xf]
      %v1340 = vld [vmem:[%s1335 + $0x10] sm:$0xf]
      %v1341 = vld [vmem:[%s1335 + $0x14] sm:$0xf]
      %v1342 = vld [vmem:[%s1335 + $0x18] sm:$0xf]
      %v1343 = vld [vmem:[%s1335 + $0x1c] sm:$0xf]
      %v1344 = vld [vmem:[%s1335 + $0x20] sm:$0xf]
      %v1345 = vld [vmem:[%s1335 + $0x24] sm:$0xf]
      %v1346 = vld [vmem:[%s1335 + $0x28] sm:$0xf]
      %v1347 = vld [vmem:[%s1335 + $0x2c] sm:$0xf]
      %v1348 = vld [vmem:[%s1335 + $0x30] sm:$0xf]
      %v1349 = vld [vmem:[%s1335 + $0x34] sm:$0xf]
      %v1350 = vld [vmem:[%s1335 + $0x38] sm:$0xf]
      %v1351 = vld [vmem:[%s1335 + $0x3c] sm:$0xf]
      %v1353 = vunpack.c.l.b16 %v1334
      %v1354 = vpack.c.b16 %v906, %v1353
      %vm1355 = vcmask 1045504
      %v1356 = vrot.slane %v1354, 2
      %v1357 = vrot.slane %v919, 2
      %v1358 = vsel %vm1355, %v1356, %v1357
      %v1359 = vrot.slane %v920, 2
      %v1360 = vsel %vm1355, %v1357, %v1359
      %v1361 = vrot.slane %v921, 2
      %v1362 = vsel %vm1355, %v1359, %v1361
      %v1363 = vrot.slane %v922, 2
      %v1364 = vsel %vm1355, %v1361, %v1363
      %v1365 = vrot.slane %v923, 2
      %v1366 = vsel %vm1355, %v1363, %v1365
      %v1367 = vrot.slane %v1114, 2
      %v1368 = vsel %vm1355, %v1365, %v1367
      %v1392 = vunpack.c.l.b16 %v1336
      %v1393 = vunpack.c.l.b16 %v1337
      %v1394 = vunpack.c.l.b16 %v1338
      %v1395 = vunpack.c.l.b16 %v1339
      %v1396 = vunpack.c.l.b16 %v1340
      %v1397 = vunpack.c.l.b16 %v1341
      %v1398 = vunpack.c.l.b16 %v1342
      %v1399 = vunpack.c.l.b16 %v1343
      %v1400 = vunpack.c.l.b16 %v1344
      %v1401 = vunpack.c.l.b16 %v1345
      %v1402 = vunpack.c.l.b16 %v1346
      %v1403 = vunpack.c.l.b16 %v1347
      %v1404 = vunpack.c.l.b16 %v1348
      %v1405 = vunpack.c.l.b16 %v1349
      %v1406 = vunpack.c.l.b16 %v1350
      %v1407 = vunpack.c.l.b16 %v1351
      %v1408 = vpack.c.b16 %v1393, %v1392
      %v1409 = vpack.c.b16 %v1395, %v1394
      %v1410 = vpack.c.b16 %v1397, %v1396
      %v1411 = vpack.c.b16 %v1399, %v1398
      %v1412 = vpack.c.b16 %v1401, %v1400
      %v1413 = vpack.c.b16 %v1403, %v1402
      %v1414 = vpack.c.b16 %v1405, %v1404
      %v1415 = vpack.c.b16 %v1407, %v1406
      %1424 = vmatprep.subr.bf16.mxu0 0
      %1425 = vmatpush1.bf16.msra.mxu0 %v1408
      %1426 = vmatprep.subr.bf16.mxu0 0
      %1427 = vmatpush1.bf16.msra.mxu0 %v1409
      %1428 = vmatprep.subr.bf16.mxu0 0
      %1429 = vmatpush1.bf16.msra.mxu0 %v1410
      %1430 = vmatprep.subr.bf16.mxu0 0
      %1431 = vmatpush1.bf16.msra.mxu0 %v1411
      %1432 = vmatprep.subr.bf16.mxu0 0
      %1433 = vmatpush1.bf16.msra.mxu0 %v1412
      %1434 = vmatprep.subr.bf16.mxu0 0
      %1435 = vmatpush1.bf16.msra.mxu0 %v1413
      %1436 = vmatprep.subr.bf16.mxu0 0
      %1437 = vmatpush1.bf16.msra.mxu0 %v1414
      %1438 = vmatprep.subr.bf16.mxu0 0
      %1439 = vmatpush1.bf16.msra.mxu0 %v1415
      %1440 = vmatprep.subr.bf16.mxu0 0
      %1441 = vmatpush1.bf16.msra.mxu0 0
      %1442 = vmatprep.subr.bf16.mxu0 0
      %1443 = vmatpush1.bf16.msra.mxu0 0
      %1444 = vmatprep.subr.bf16.mxu0 0
      %1445 = vmatpush1.bf16.msra.mxu0 0
      %1446 = vmatprep.subr.bf16.mxu0 0
      %1447 = vmatpush1.bf16.msra.mxu0 0
      %1448 = vmatprep.subr.bf16.mxu0 0
      %1449 = vmatpush1.bf16.msra.mxu0 0
      %1450 = vmatprep.subr.bf16.mxu0 0
      %1451 = vmatpush1.bf16.msra.mxu0 0
      %1452 = vmatprep.subr.bf16.mxu0 0
      %1453 = vmatpush1.bf16.msra.mxu0 0
      %1454 = vmatprep.subr.bf16.mxu0 0
      %1455 = vmatpush1.bf16.msra.mxu0 0
      %1456 = vmatprep.mubr.bf16.mxu0 0
      %1457 = vmatmul.mubr.bf16.gmra.mrb[0].mxu0 %v1358
      %v1458 = vpop.f32.mrb[0].mxu0
      %v1459 = vadd.f32 0.0, %v1458
      %v1460 = vpop.f32.mrb[0].mxu0
      %v1461 = vpop.f32.mrb[0].mxu0
      %v1462 = vadd.f32 0.0, %v1461
      %v1463 = vpop.f32.mrb[0].mxu0
      %1464 = vmatprep.mubr.bf16.mxu0 0
      %1465 = vmatmul.mubr.bf16.gmra.mrb[0].mxu0 %v1360
      %v1466 = vpop.f32.mrb[0].mxu0
      %v1467 = vadd.f32 0.0, %v1466
      %v1468 = vpop.f32.mrb[0].mxu0
      %v1469 = vpop.f32.mrb[0].mxu0
      %v1470 = vadd.f32 0.0, %v1469
      %v1471 = vpop.f32.mrb[0].mxu0
      %1472 = vmatprep.mubr.bf16.mxu0 0
      %1473 = vmatmul.mubr.bf16.gmra.mrb[0].mxu0 %v1362
      %v1474 = vpop.f32.mrb[0].mxu0
      %v1475 = vadd.f32 0.0, %v1474
      %v1476 = vpop.f32.mrb[0].mxu0
      %v1477 = vpop.f32.mrb[0].mxu0
      %v1478 = vadd.f32 0.0, %v1477
      %v1479 = vpop.f32.mrb[0].mxu0
      %1480 = vmatprep.mubr.bf16.mxu0 0
      %1481 = vmatmul.mubr.bf16.gmra.mrb[0].mxu0 %v1364
      %v1482 = vpop.f32.mrb[0].mxu0
      %v1483 = vadd.f32 0.0, %v1482
      %v1484 = vpop.f32.mrb[0].mxu0
      %v1485 = vpop.f32.mrb[0].mxu0
      %v1486 = vadd.f32 0.0, %v1485
      %v1487 = vpop.f32.mrb[0].mxu0
      %1488 = vmatprep.mubr.bf16.mxu0 0
      %1489 = vmatmul.mubr.bf16.gmra.mrb[0].mxu0 %v1366
      %v1490 = vpop.f32.mrb[0].mxu0
      %v1491 = vadd.f32 0.0, %v1490
      %v1492 = vpop.f32.mrb[0].mxu0
      %v1493 = vpop.f32.mrb[0].mxu0
      %v1494 = vadd.f32 0.0, %v1493
      %v1495 = vpop.f32.mrb[0].mxu0
      %1496 = vmatprep.mubr.bf16.mxu0 0
      %1497 = vmatmul.mubr.bf16.gmra.mrb[0].mxu0 %v1368
      %v1498 = vpop.f32.mrb[0].mxu0
      %v1499 = vadd.f32 0.0, %v1498
      %v1500 = vpop.f32.mrb[0].mxu0
      %v1501 = vpop.f32.mrb[0].mxu0
      %v1502 = vadd.f32 0.0, %v1501
      %v1503 = vpop.f32.mrb[0].mxu0
      %1504 = vmatprep.mubr.bf16.mxu0 0
      %1505 = vmatmul.mubr.bf16.gmra.mrb[0].mxu0 %v1367
      %v1506 = vpop.f32.mrb[0].mxu0
      %v1507 = vadd.f32 0.0, %v1506
      %v1508 = vpop.f32.mrb[0].mxu0
      %v1509 = vpop.f32.mrb[0].mxu0
      %v1510 = vpop.f32.mrb[0].mxu0
      %1511 = vdwg.mxu0
      %v1512 = vadd.f32 %v1321, %v1459
      %v1513 = vadd.f32 %v1322, %v1462
      %v1514 = vadd.f32 %v1323, %v1467
      %v1515 = vadd.f32 %v1324, %v1470
      %v1516 = vadd.f32 %v1325, %v1475
      %v1517 = vadd.f32 %v1326, %v1478
      %v1518 = vadd.f32 %v1327, %v1483
      %v1519 = vadd.f32 %v1328, %v1486
      %v1520 = vadd.f32 %v1329, %v1491
      %v1521 = vadd.f32 %v1330, %v1494
      %v1522 = vadd.f32 %v1331, %v1499
      %v1523 = vadd.f32 %v1332, %v1502
      %v1524 = vadd.f32 %v1333, %v1507
      %v1525 = vld [vmem:[%s234 + $0x8] sm:$0xc]
      %v1526 = vld [vmem:[%s234 + $0xc] sm:$0xf]
      %v1527 = vld [vmem:[%s234 + $0x10] sm:$0xf]
      %v1528 = vld [vmem:[%s234 + $0x14] sm:$0xf]
      %v1529 = vld [vmem:[%s234 + $0x18] sm:$0xf]
      %v1530 = vld [vmem:[%s234 + $0x1c] sm:$0xf]
      %v1531 = vld [vmem:[%s234 + $0x20] sm:$0xf]
      %v1532 = vld [vmem:[%s234 + $0x24] sm:$0xf]
      %v1533 = vld [vmem:[%s234 + $0x28] sm:$0xf]
      %v1534 = vld [vmem:[%s234 + $0x2c] sm:$0xf]
      %v1535 = vld [vmem:[%s234 + $0x30] sm:$0xf]
      %v1536 = vld [vmem:[%s234 + $0x34] sm:$0xf]
      %v1537 = vld [vmem:[%s234 + $0x38] sm:$0xf]
      %s1538 = scalar_lea.vmem %s1, 384
      %v1539 = vld [vmem:[%s1538] sm:$0xf]
      %v1540 = vld [vmem:[%s1538 + $0x4] sm:$0xf]
      %v1541 = vld [vmem:[%s1538 + $0x8] sm:$0xf]
      %v1542 = vld [vmem:[%s1538 + $0xc] sm:$0xf]
      %v1543 = vld [vmem:[%s1538 + $0x10] sm:$0xf]
      %v1544 = vld [vmem:[%s1538 + $0x14] sm:$0xf]
      %v1545 = vld [vmem:[%s1538 + $0x18] sm:$0xf]
      %v1546 = vld [vmem:[%s1538 + $0x1c] sm:$0xf]
      %v1547 = vld [vmem:[%s1538 + $0x20] sm:$0xf]
      %v1548 = vld [vmem:[%s1538 + $0x24] sm:$0xf]
      %v1549 = vld [vmem:[%s1538 + $0x28] sm:$0xf]
      %v1550 = vld [vmem:[%s1538 + $0x2c] sm:$0xf]
      %v1551 = vld [vmem:[%s1538 + $0x30] sm:$0xf]
      %v1552 = vld [vmem:[%s1538 + $0x34] sm:$0xf]
      %v1553 = vld [vmem:[%s1538 + $0x38] sm:$0xf]
      %v1554 = vld [vmem:[%s1538 + $0x3c] sm:$0xf]
      %v1568 = vunpack.c.l.b16 %v1525
      %v1569 = vunpack.c.l.b16 %v1526
      %v1570 = vunpack.c.l.b16 %v1527
      %v1571 = vunpack.c.l.b16 %v1528
      %v1572 = vunpack.c.l.b16 %v1529
      %v1573 = vunpack.c.l.b16 %v1530
      %v1574 = vunpack.c.l.b16 %v1531
      %v1575 = vunpack.c.l.b16 %v1532
      %v1576 = vunpack.c.l.b16 %v1533
      %v1577 = vunpack.c.l.b16 %v1534
      %v1578 = vunpack.c.l.b16 %v1535
      %v1579 = vunpack.c.l.b16 %v1536
      %v1580 = vunpack.c.l.b16 %v1537
      %v1581 = vpack.c.b16 %v1569, %v1568
      %v1582 = vpack.c.b16 %v1571, %v1570
      %v1583 = vpack.c.b16 %v1573, %v1572
      %v1584 = vpack.c.b16 %v1575, %v1574
      %v1585 = vpack.c.b16 %v1577, %v1576
      %v1586 = vpack.c.b16 %v1579, %v1578
      %v1587 = vpack.c.b16 %v1580, %v1580
      %v1588 = vrot.slane %v1581, 2
      %v1589 = vrot.slane %v1582, 2
      %v1590 = vsel %vm1355, %v1588, %v1589
      %v1591 = vrot.slane %v1583, 2
      %v1592 = vsel %vm1355, %v1589, %v1591
      %v1593 = vrot.slane %v1584, 2
      %v1594 = vsel %vm1355, %v1591, %v1593
      %v1595 = vrot.slane %v1585, 2
      %v1596 = vsel %vm1355, %v1593, %v1595
      %v1597 = vrot.slane %v1586, 2
      %v1598 = vsel %vm1355, %v1595, %v1597
      %v1599 = vrot.slane %v1587, 2
      %v1600 = vsel %vm1355, %v1597, %v1599
      %v1624 = vunpack.c.l.b16 %v1539
      %v1625 = vunpack.c.l.b16 %v1540
      %v1626 = vunpack.c.l.b16 %v1541
      %v1627 = vunpack.c.l.b16 %v1542
      %v1628 = vunpack.c.l.b16 %v1543
      %v1629 = vunpack.c.l.b16 %v1544
      %v1630 = vunpack.c.l.b16 %v1545
      %v1631 = vunpack.c.l.b16 %v1546
      %v1632 = vunpack.c.l.b16 %v1547
      %v1633 = vunpack.c.l.b16 %v1548
      %v1634 = vunpack.c.l.b16 %v1549
      %v1635 = vunpack.c.l.b16 %v1550
      %v1636 = vunpack.c.l.b16 %v1551
      %v1637 = vunpack.c.l.b16 %v1552
      %v1638 = vunpack.c.l.b16 %v1553
      %v1639 = vunpack.c.l.b16 %v1554
      %v1640 = vpack.c.b16 %v1625, %v1624
      %v1641 = vpack.c.b16 %v1627, %v1626
      %v1642 = vpack.c.b16 %v1629, %v1628
      %v1643 = vpack.c.b16 %v1631, %v1630
      %v1644 = vpack.c.b16 %v1633, %v1632
      %v1645 = vpack.c.b16 %v1635, %v1634
      %v1646 = vpack.c.b16 %v1637, %v1636
      %v1647 = vpack.c.b16 %v1639, %v1638
      %1656 = vmatprep.subr.bf16.mxu0 0
      %1657 = vmatpush1.bf16.msra.mxu0 %v1640
      %1658 = vmatprep.subr.bf16.mxu0 0
      %1659 = vmatpush1.bf16.msra.mxu0 %v1641
      %1660 = vmatprep.subr.bf16.mxu0 0
      %1661 = vmatpush1.bf16.msra.mxu0 %v1642
      %1662 = vmatprep.subr.bf16.mxu0 0
      %1663 = vmatpush1.bf16.msra.mxu0 %v1643
      %1664 = vmatprep.subr.bf16.mxu0 0
      %1665 = vmatpush1.bf16.msra.mxu0 %v1644
      %1666 = vmatprep.subr.bf16.mxu0 0
      %1667 = vmatpush1.bf16.msra.mxu0 %v1645
      %1668 = vmatprep.subr.bf16.mxu0 0
      %1669 = vmatpush1.bf16.msra.mxu0 %v1646
      %1670 = vmatprep.subr.bf16.mxu0 0
      %1671 = vmatpush1.bf16.msra.mxu0 %v1647
      %1672 = vmatprep.subr.bf16.mxu0 0
      %1673 = vmatpush1.bf16.msra.mxu0 0
      %1674 = vmatprep.subr.bf16.mxu0 0
      %1675 = vmatpush1.bf16.msra.mxu0 0
      %1676 = vmatprep.subr.bf16.mxu0 0
      %1677 = vmatpush1.bf16.msra.mxu0 0
      %1678 = vmatprep.subr.bf16.mxu0 0
      %1679 = vmatpush1.bf16.msra.mxu0 0
      %1680 = vmatprep.subr.bf16.mxu0 0
      %1681 = vmatpush1.bf16.msra.mxu0 0
      %1682 = vmatprep.subr.bf16.mxu0 0
      %1683 = vmatpush1.bf16.msra.mxu0 0
      %1684 = vmatprep.subr.bf16.mxu0 0
      %1685 = vmatpush1.bf16.msra.mxu0 0
      %1686 = vmatprep.subr.bf16.mxu0 0
      %1687 = vmatpush1.bf16.msra.mxu0 0
      %1688 = vmatprep.mubr.bf16.mxu0 0
      %1689 = vmatmul.mubr.bf16.gmra.mrb[0].mxu0 %v1590
      %v1690 = vpop.f32.mrb[0].mxu0
      %v1691 = vadd.f32 0.0, %v1690
      %v1692 = vpop.f32.mrb[0].mxu0
      %v1693 = vpop.f32.mrb[0].mxu0
      %v1694 = vadd.f32 0.0, %v1693
      %v1695 = vpop.f32.mrb[0].mxu0
      %1696 = vmatprep.mubr.bf16.mxu0 0
      %1697 = vmatmul.mubr.bf16.gmra.mrb[0].mxu0 %v1592
      %v1698 = vpop.f32.mrb[0].mxu0
      %v1699 = vadd.f32 0.0, %v1698
      %v1700 = vpop.f32.mrb[0].mxu0
      %v1701 = vpop.f32.mrb[0].mxu0
      %v1702 = vadd.f32 0.0, %v1701
      %v1703 = vpop.f32.mrb[0].mxu0
      %1704 = vmatprep.mubr.bf16.mxu0 0
      %1705 = vmatmul.mubr.bf16.gmra.mrb[0].mxu0 %v1594
      %v1706 = vpop.f32.mrb[0].mxu0
      %v1707 = vadd.f32 0.0, %v1706
      %v1708 = vpop.f32.mrb[0].mxu0
      %v1709 = vpop.f32.mrb[0].mxu0
      %v1710 = vadd.f32 0.0, %v1709
      %v1711 = vpop.f32.mrb[0].mxu0
      %1712 = vmatprep.mubr.bf16.mxu0 0
      %1713 = vmatmul.mubr.bf16.gmra.mrb[0].mxu0 %v1596
      %v1714 = vpop.f32.mrb[0].mxu0
      %v1715 = vadd.f32 0.0, %v1714
      %v1716 = vpop.f32.mrb[0].mxu0
      %v1717 = vpop.f32.mrb[0].mxu0
      %v1718 = vadd.f32 0.0, %v1717
      %v1719 = vpop.f32.mrb[0].mxu0
      %1720 = vmatprep.mubr.bf16.mxu0 0
      %1721 = vmatmul.mubr.bf16.gmra.mrb[0].mxu0 %v1598
      %v1722 = vpop.f32.mrb[0].mxu0
      %v1723 = vadd.f32 0.0, %v1722
      %v1724 = vpop.f32.mrb[0].mxu0
      %v1725 = vpop.f32.mrb[0].mxu0
      %v1726 = vadd.f32 0.0, %v1725
      %v1727 = vpop.f32.mrb[0].mxu0
      %1728 = vmatprep.mubr.bf16.mxu0 0
      %1729 = vmatmul.mubr.bf16.gmra.mrb[0].mxu0 %v1600
      %v1730 = vpop.f32.mrb[0].mxu0
      %v1731 = vadd.f32 0.0, %v1730
      %v1732 = vpop.f32.mrb[0].mxu0
      %v1733 = vpop.f32.mrb[0].mxu0
      %v1734 = vadd.f32 0.0, %v1733
      %v1735 = vpop.f32.mrb[0].mxu0
      %1736 = vmatprep.mubr.bf16.mxu0 0
      %1737 = vmatmul.mubr.bf16.gmra.mrb[0].mxu0 %v1599
      %v1738 = vpop.f32.mrb[0].mxu0
      %v1739 = vadd.f32 0.0, %v1738
      %v1740 = vpop.f32.mrb[0].mxu0
      %v1741 = vpop.f32.mrb[0].mxu0
      %v1742 = vpop.f32.mrb[0].mxu0
      %1743 = vdwg.mxu0
      %v1744 = vadd.f32 %v1512, %v1691
      %v1745 = vadd.f32 %v1513, %v1694
      %v1746 = vadd.f32 %v1514, %v1699
      %v1747 = vadd.f32 %v1515, %v1702
      %v1748 = vadd.f32 %v1516, %v1707
      %v1749 = vadd.f32 %v1517, %v1710
      %v1750 = vadd.f32 %v1518, %v1715
      %v1751 = vadd.f32 %v1519, %v1718
      %v1752 = vadd.f32 %v1520, %v1723
      %v1753 = vadd.f32 %v1521, %v1726
      %v1754 = vadd.f32 %v1522, %v1731
      %v1755 = vadd.f32 %v1523, %v1734
      %v1756 = vadd.f32 %v1524, %v1739
      %v1757 = vld [vmem:[%s234 + $0x8] sm:$0xc]
      %v1758 = vld [vmem:[%s234 + $0xc] sm:$0xf]
      %v1759 = vld [vmem:[%s234 + $0x10] sm:$0xf]
      %v1760 = vld [vmem:[%s234 + $0x14] sm:$0xf]
      %v1761 = vld [vmem:[%s234 + $0x18] sm:$0xf]
      %v1762 = vld [vmem:[%s234 + $0x1c] sm:$0xf]
      %v1763 = vld [vmem:[%s234 + $0x20] sm:$0xf]
      %v1764 = vld [vmem:[%s234 + $0x24] sm:$0xf]
      %v1765 = vld [vmem:[%s234 + $0x28] sm:$0xf]
      %v1766 = vld [vmem:[%s234 + $0x2c] sm:$0xf]
      %v1767 = vld [vmem:[%s234 + $0x30] sm:$0xf]
      %v1768 = vld [vmem:[%s234 + $0x34] sm:$0xf]
      %v1769 = vld [vmem:[%s234 + $0x38] sm:$0xf]
      %v1770 = vld [vmem:[%s234 + $0x3c] sm:$0x1]
      %s1771 = scalar_lea.vmem %s1, 448
      %v1772 = vld [vmem:[%s1771] sm:$0xf]
      %v1773 = vld [vmem:[%s1771 + $0x4] sm:$0xf]
      %v1774 = vld [vmem:[%s1771 + $0x8] sm:$0xf]
      %v1775 = vld [vmem:[%s1771 + $0xc] sm:$0xf]
      %v1776 = vld [vmem:[%s1771 + $0x10] sm:$0xf]
      %v1777 = vld [vmem:[%s1771 + $0x14] sm:$0xf]
      %v1778 = vld [vmem:[%s1771 + $0x18] sm:$0xf]
      %v1779 = vld [vmem:[%s1771 + $0x1c] sm:$0xf]
      %v1780 = vld [vmem:[%s1771 + $0x20] sm:$0xf]
      %v1781 = vld [vmem:[%s1771 + $0x24] sm:$0xf]
      %v1782 = vld [vmem:[%s1771 + $0x28] sm:$0xf]
      %v1783 = vld [vmem:[%s1771 + $0x2c] sm:$0xf]
      %v1784 = vld [vmem:[%s1771 + $0x30] sm:$0xf]
      %v1785 = vld [vmem:[%s1771 + $0x34] sm:$0xf]
      %v1786 = vld [vmem:[%s1771 + $0x38] sm:$0xf]
      %v1787 = vld [vmem:[%s1771 + $0x3c] sm:$0xf]
      %v1802 = vunpack.c.l.b16 %v1757
      %v1803 = vunpack.c.l.b16 %v1758
      %v1804 = vunpack.c.l.b16 %v1759
      %v1805 = vunpack.c.l.b16 %v1760
      %v1806 = vunpack.c.l.b16 %v1761
      %v1807 = vunpack.c.l.b16 %v1762
      %v1808 = vunpack.c.l.b16 %v1763
      %v1809 = vunpack.c.l.b16 %v1764
      %v1810 = vunpack.c.l.b16 %v1765
      %v1811 = vunpack.c.l.b16 %v1766
      %v1812 = vunpack.c.l.b16 %v1767
      %v1813 = vunpack.c.l.b16 %v1768
      %v1814 = vunpack.c.l.b16 %v1769
      %v1815 = vunpack.c.l.b16 %v1770
      %v1816 = vpack.c.b16 %v1803, %v1802
      %v1817 = vpack.c.b16 %v1805, %v1804
      %v1818 = vpack.c.b16 %v1807, %v1806
      %v1819 = vpack.c.b16 %v1809, %v1808
      %v1820 = vpack.c.b16 %v1811, %v1810
      %v1821 = vpack.c.b16 %v1813, %v1812
      %v1822 = vpack.c.b16 %v1815, %v1814
      %vm1823 = vsmask.f32 5376
      %v1825 = vshrl.u32 %v1816, 16
      %v1827 = vrot.slane %v1825, 2
      %v1828 = vshll.u32 %v1816, 16
      %v1830 = vrot.slane %v1828, 3
      %v1831 = vor.u32 %v1827, %v1830
      %v1833 = vshrl.u32 %v1817, 16
      %v1835 = vrot.slane %v1833, 2
      %v1836 = vshll.u32 %v1817, 16
      %v1838 = vrot.slane %v1836, 3
      %v1839 = vor.u32 %v1835, %v1838
      %v1840 = vsel %vm1823, %v1831, %v1839
      %v1842 = vshrl.u32 %v1818, 16
      %v1844 = vrot.slane %v1842, 2
      %v1845 = vshll.u32 %v1818, 16
      %v1847 = vrot.slane %v1845, 3
      %v1848 = vor.u32 %v1844, %v1847
      %v1849 = vsel %vm1823, %v1839, %v1848
      %v1851 = vshrl.u32 %v1819, 16
      %v1853 = vrot.slane %v1851, 2
      %v1854 = vshll.u32 %v1819, 16
      %v1856 = vrot.slane %v1854, 3
      %v1857 = vor.u32 %v1853, %v1856
      %v1858 = vsel %vm1823, %v1848, %v1857
      %v1860 = vshrl.u32 %v1820, 16
      %v1862 = vrot.slane %v1860, 2
      %v1863 = vshll.u32 %v1820, 16
      %v1865 = vrot.slane %v1863, 3
      %v1866 = vor.u32 %v1862, %v1865
      %v1867 = vsel %vm1823, %v1857, %v1866
      %v1869 = vshrl.u32 %v1821, 16
      %v1871 = vrot.slane %v1869, 2
      %v1872 = vshll.u32 %v1821, 16
      %v1874 = vrot.slane %v1872, 3
      %v1875 = vor.u32 %v1871, %v1874
      %v1876 = vsel %vm1823, %v1866, %v1875
      %v1878 = vshrl.u32 %v1822, 16
      %v1880 = vrot.slane %v1878, 2
      %v1881 = vshll.u32 %v1822, 16
      %v1883 = vrot.slane %v1881, 3
      %v1884 = vor.u32 %v1880, %v1883
      %v1885 = vsel %vm1823, %v1875, %v1884
      %v1909 = vunpack.c.l.b16 %v1772
      %v1910 = vunpack.c.l.b16 %v1773
      %v1911 = vunpack.c.l.b16 %v1774
      %v1912 = vunpack.c.l.b16 %v1775
      %v1913 = vunpack.c.l.b16 %v1776
      %v1914 = vunpack.c.l.b16 %v1777
      %v1915 = vunpack.c.l.b16 %v1778
      %v1916 = vunpack.c.l.b16 %v1779
      %v1917 = vunpack.c.l.b16 %v1780
      %v1918 = vunpack.c.l.b16 %v1781
      %v1919 = vunpack.c.l.b16 %v1782
      %v1920 = vunpack.c.l.b16 %v1783
      %v1921 = vunpack.c.l.b16 %v1784
      %v1922 = vunpack.c.l.b16 %v1785
      %v1923 = vunpack.c.l.b16 %v1786
      %v1924 = vunpack.c.l.b16 %v1787
      %v1925 = vpack.c.b16 %v1910, %v1909
      %v1926 = vpack.c.b16 %v1912, %v1911
      %v1927 = vpack.c.b16 %v1914, %v1913
      %v1928 = vpack.c.b16 %v1916, %v1915
      %v1929 = vpack.c.b16 %v1918, %v1917
      %v1930 = vpack.c.b16 %v1920, %v1919
      %v1931 = vpack.c.b16 %v1922, %v1921
      %v1932 = vpack.c.b16 %v1924, %v1923
      %1941 = vmatprep.subr.bf16.mxu0 0
      %1942 = vmatpush1.bf16.msra.mxu0 %v1925
      %1943 = vmatprep.subr.bf16.mxu0 0
      %1944 = vmatpush1.bf16.msra.mxu0 %v1926
      %1945 = vmatprep.subr.bf16.mxu0 0
      %1946 = vmatpush1.bf16.msra.mxu0 %v1927
      %1947 = vmatprep.subr.bf16.mxu0 0
      %1948 = vmatpush1.bf16.msra.mxu0 %v1928
      %1949 = vmatprep.subr.bf16.mxu0 0
      %1950 = vmatpush1.bf16.msra.mxu0 %v1929
      %1951 = vmatprep.subr.bf16.mxu0 0
      %1952 = vmatpush1.bf16.msra.mxu0 %v1930
      %1953 = vmatprep.subr.bf16.mxu0 0
      %1954 = vmatpush1.bf16.msra.mxu0 %v1931
      %1955 = vmatprep.subr.bf16.mxu0 0
      %1956 = vmatpush1.bf16.msra.mxu0 %v1932
      %1957 = vmatprep.subr.bf16.mxu0 0
      %1958 = vmatpush1.bf16.msra.mxu0 0
      %1959 = vmatprep.subr.bf16.mxu0 0
      %1960 = vmatpush1.bf16.msra.mxu0 0
      %1961 = vmatprep.subr.bf16.mxu0 0
      %1962 = vmatpush1.bf16.msra.mxu0 0
      %1963 = vmatprep.subr.bf16.mxu0 0
      %1964 = vmatpush1.bf16.msra.mxu0 0
      %1965 = vmatprep.subr.bf16.mxu0 0
      %1966 = vmatpush1.bf16.msra.mxu0 0
      %1967 = vmatprep.subr.bf16.mxu0 0
      %1968 = vmatpush1.bf16.msra.mxu0 0
      %1969 = vmatprep.subr.bf16.mxu0 0
      %1970 = vmatpush1.bf16.msra.mxu0 0
      %1971 = vmatprep.subr.bf16.mxu0 0
      %1972 = vmatpush1.bf16.msra.mxu0 0
      %1973 = vmatprep.mubr.bf16.mxu0 0
      %1974 = vmatmul.mubr.bf16.gmra.mrb[0].mxu0 %v1840
      %v1975 = vpop.f32.mrb[0].mxu0
      %v1976 = vadd.f32 0.0, %v1975
      %v1977 = vpop.f32.mrb[0].mxu0
      %v1978 = vpop.f32.mrb[0].mxu0
      %v1979 = vadd.f32 0.0, %v1978
      %v1980 = vpop.f32.mrb[0].mxu0
      %1981 = vmatprep.mubr.bf16.mxu0 0
      %1982 = vmatmul.mubr.bf16.gmra.mrb[0].mxu0 %v1849
      %v1983 = vpop.f32.mrb[0].mxu0
      %v1984 = vadd.f32 0.0, %v1983
      %v1985 = vpop.f32.mrb[0].mxu0
      %v1986 = vpop.f32.mrb[0].mxu0
      %v1987 = vadd.f32 0.0, %v1986
      %v1988 = vpop.f32.mrb[0].mxu0
      %1989 = vmatprep.mubr.bf16.mxu0 0
      %1990 = vmatmul.mubr.bf16.gmra.mrb[0].mxu0 %v1858
      %v1991 = vpop.f32.mrb[0].mxu0
      %v1992 = vadd.f32 0.0, %v1991
      %v1993 = vpop.f32.mrb[0].mxu0
      %v1994 = vpop.f32.mrb[0].mxu0
      %v1995 = vadd.f32 0.0, %v1994
      %v1996 = vpop.f32.mrb[0].mxu0
      %1997 = vmatprep.mubr.bf16.mxu0 0
      %1998 = vmatmul.mubr.bf16.gmra.mrb[0].mxu0 %v1867
      %v1999 = vpop.f32.mrb[0].mxu0
      %v2000 = vadd.f32 0.0, %v1999
      %v2001 = vpop.f32.mrb[0].mxu0
      %v2002 = vpop.f32.mrb[0].mxu0
      %v2003 = vadd.f32 0.0, %v2002
      %v2004 = vpop.f32.mrb[0].mxu0
      %2005 = vmatprep.mubr.bf16.mxu0 0
      %2006 = vmatmul.mubr.bf16.gmra.mrb[0].mxu0 %v1876
      %v2007 = vpop.f32.mrb[0].mxu0
      %v2008 = vadd.f32 0.0, %v2007
      %v2009 = vpop.f32.mrb[0].mxu0
      %v2010 = vpop.f32.mrb[0].mxu0
      %v2011 = vadd.f32 0.0, %v2010
      %v2012 = vpop.f32.mrb[0].mxu0
      %2013 = vmatprep.mubr.bf16.mxu0 0
      %2014 = vmatmul.mubr.bf16.gmra.mrb[0].mxu0 %v1885
      %v2015 = vpop.f32.mrb[0].mxu0
      %v2016 = vadd.f32 0.0, %v2015
      %v2017 = vpop.f32.mrb[0].mxu0
      %v2018 = vpop.f32.mrb[0].mxu0
      %v2019 = vadd.f32 0.0, %v2018
      %v2020 = vpop.f32.mrb[0].mxu0
      %2021 = vmatprep.mubr.bf16.mxu0 0
      %2022 = vmatmul.mubr.bf16.gmra.mrb[0].mxu0 %v1884
      %v2023 = vpop.f32.mrb[0].mxu0
      %v2024 = vadd.f32 0.0, %v2023
      %v2025 = vpop.f32.mrb[0].mxu0
      %v2026 = vpop.f32.mrb[0].mxu0
      %v2027 = vpop.f32.mrb[0].mxu0
      %2028 = vdwg.mxu0
      %v2029 = vadd.f32 %v1744, %v1976
      %v2030 = vadd.f32 %v1745, %v1979
      %v2031 = vadd.f32 %v1746, %v1984
      %v2032 = vadd.f32 %v1747, %v1987
      %v2033 = vadd.f32 %v1748, %v1992
      %v2034 = vadd.f32 %v1749, %v1995
      %v2035 = vadd.f32 %v1750, %v2000
      %v2036 = vadd.f32 %v1751, %v2003
      %v2037 = vadd.f32 %v1752, %v2008
      %v2038 = vadd.f32 %v1753, %v2011
      %v2039 = vadd.f32 %v1754, %v2016
      %v2040 = vadd.f32 %v1755, %v2019
      %v2041 = vadd.f32 %v1756, %v2024
      %v2042 = vld [vmem:[%s234 + $0x8] sm:$0x8]
      %s2043 = scalar_lea.vmem %s1, 512
      %v2044 = vld [vmem:[%s2043] sm:$0xf]
      %v2045 = vld [vmem:[%s2043 + $0x4] sm:$0xf]
      %v2046 = vld [vmem:[%s2043 + $0x8] sm:$0xf]
      %v2047 = vld [vmem:[%s2043 + $0xc] sm:$0xf]
      %v2048 = vld [vmem:[%s2043 + $0x10] sm:$0xf]
      %v2049 = vld [vmem:[%s2043 + $0x14] sm:$0xf]
      %v2050 = vld [vmem:[%s2043 + $0x18] sm:$0xf]
      %v2051 = vld [vmem:[%s2043 + $0x1c] sm:$0xf]
      %v2052 = vld [vmem:[%s2043 + $0x20] sm:$0xf]
      %v2053 = vld [vmem:[%s2043 + $0x24] sm:$0xf]
      %v2054 = vld [vmem:[%s2043 + $0x28] sm:$0xf]
      %v2055 = vld [vmem:[%s2043 + $0x2c] sm:$0xf]
      %v2056 = vld [vmem:[%s2043 + $0x30] sm:$0xf]
      %v2057 = vld [vmem:[%s2043 + $0x34] sm:$0xf]
      %v2058 = vld [vmem:[%s2043 + $0x38] sm:$0xf]
      %v2059 = vld [vmem:[%s2043 + $0x3c] sm:$0xf]
      %v2061 = vunpack.c.l.b16 %v2042
      %v2062 = vpack.c.b16 %v1803, %v2061
      %vm2063 = vcmask 1044480
      %v2064 = vrot.slane %v2062, 3
      %v2065 = vrot.slane %v1817, 3
      %v2066 = vsel %vm2063, %v2064, %v2065
      %v2067 = vrot.slane %v1818, 3
      %v2068 = vsel %vm2063, %v2065, %v2067
      %v2069 = vrot.slane %v1819, 3
      %v2070 = vsel %vm2063, %v2067, %v2069
      %v2071 = vrot.slane %v1820, 3
      %v2072 = vsel %vm2063, %v2069, %v2071
      %v2073 = vrot.slane %v1821, 3
      %v2074 = vsel %vm2063, %v2071, %v2073
      %v2075 = vrot.slane %v1822, 3
      %v2076 = vsel %vm2063, %v2073, %v2075
      %v2100 = vunpack.c.l.b16 %v2044
      %v2101 = vunpack.c.l.b16 %v2045
      %v2102 = vunpack.c.l.b16 %v2046
      %v2103 = vunpack.c.l.b16 %v2047
      %v2104 = vunpack.c.l.b16 %v2048
      %v2105 = vunpack.c.l.b16 %v2049
      %v2106 = vunpack.c.l.b16 %v2050
      %v2107 = vunpack.c.l.b16 %v2051
      %v2108 = vunpack.c.l.b16 %v2052
      %v2109 = vunpack.c.l.b16 %v2053
      %v2110 = vunpack.c.l.b16 %v2054
      %v2111 = vunpack.c.l.b16 %v2055
      %v2112 = vunpack.c.l.b16 %v2056
      %v2113 = vunpack.c.l.b16 %v2057
      %v2114 = vunpack.c.l.b16 %v2058
      %v2115 = vunpack.c.l.b16 %v2059
      %v2116 = vpack.c.b16 %v2101, %v2100
      %v2117 = vpack.c.b16 %v2103, %v2102
      %v2118 = vpack.c.b16 %v2105, %v2104
      %v2119 = vpack.c.b16 %v2107, %v2106
      %v2120 = vpack.c.b16 %v2109, %v2108
      %v2121 = vpack.c.b16 %v2111, %v2110
      %v2122 = vpack.c.b16 %v2113, %v2112
      %v2123 = vpack.c.b16 %v2115, %v2114
      %2132 = vmatprep.subr.bf16.mxu0 0
      %2133 = vmatpush1.bf16.msra.mxu0 %v2116
      %2134 = vmatprep.subr.bf16.mxu0 0
      %2135 = vmatpush1.bf16.msra.mxu0 %v2117
      %2136 = vmatprep.subr.bf16.mxu0 0
      %2137 = vmatpush1.bf16.msra.mxu0 %v2118
      %2138 = vmatprep.subr.bf16.mxu0 0
      %2139 = vmatpush1.bf16.msra.mxu0 %v2119
      %2140 = vmatprep.subr.bf16.mxu0 0
      %2141 = vmatpush1.bf16.msra.mxu0 %v2120
      %2142 = vmatprep.subr.bf16.mxu0 0
      %2143 = vmatpush1.bf16.msra.mxu0 %v2121
      %2144 = vmatprep.subr.bf16.mxu0 0
      %2145 = vmatpush1.bf16.msra.mxu0 %v2122
      %2146 = vmatprep.subr.bf16.mxu0 0
      %2147 = vmatpush1.bf16.msra.mxu0 %v2123
      %2148 = vmatprep.subr.bf16.mxu0 0
      %2149 = vmatpush1.bf16.msra.mxu0 0
      %2150 = vmatprep.subr.bf16.mxu0 0
      %2151 = vmatpush1.bf16.msra.mxu0 0
      %2152 = vmatprep.subr.bf16.mxu0 0
      %2153 = vmatpush1.bf16.msra.mxu0 0
      %2154 = vmatprep.subr.bf16.mxu0 0
      %2155 = vmatpush1.bf16.msra.mxu0 0
      %2156 = vmatprep.subr.bf16.mxu0 0
      %2157 = vmatpush1.bf16.msra.mxu0 0
      %2158 = vmatprep.subr.bf16.mxu0 0
      %2159 = vmatpush1.bf16.msra.mxu0 0
      %2160 = vmatprep.subr.bf16.mxu0 0
      %2161 = vmatpush1.bf16.msra.mxu0 0
      %2162 = vmatprep.subr.bf16.mxu0 0
      %2163 = vmatpush1.bf16.msra.mxu0 0
      %2164 = vmatprep.mubr.bf16.mxu0 0
      %2165 = vmatmul.mubr.bf16.gmra.mrb[0].mxu0 %v2066
      %v2166 = vpop.f32.mrb[0].mxu0
      %v2167 = vadd.f32 0.0, %v2166
      %v2168 = vpop.f32.mrb[0].mxu0
      %v2169 = vpop.f32.mrb[0].mxu0
      %v2170 = vadd.f32 0.0, %v2169
      %v2171 = vpop.f32.mrb[0].mxu0
      %2172 = vmatprep.mubr.bf16.mxu0 0
      %2173 = vmatmul.mubr.bf16.gmra.mrb[0].mxu0 %v2068
      %v2174 = vpop.f32.mrb[0].mxu0
      %v2175 = vadd.f32 0.0, %v2174
      %v2176 = vpop.f32.mrb[0].mxu0
      %v2177 = vpop.f32.mrb[0].mxu0
      %v2178 = vadd.f32 0.0, %v2177
      %v2179 = vpop.f32.mrb[0].mxu0
      %2180 = vmatprep.mubr.bf16.mxu0 0
      %2181 = vmatmul.mubr.bf16.gmra.mrb[0].mxu0 %v2070
      %v2182 = vpop.f32.mrb[0].mxu0
      %v2183 = vadd.f32 0.0, %v2182
      %v2184 = vpop.f32.mrb[0].mxu0
      %v2185 = vpop.f32.mrb[0].mxu0
      %v2186 = vadd.f32 0.0, %v2185
      %v2187 = vpop.f32.mrb[0].mxu0
      %2188 = vmatprep.mubr.bf16.mxu0 0
      %2189 = vmatmul.mubr.bf16.gmra.mrb[0].mxu0 %v2072
      %v2190 = vpop.f32.mrb[0].mxu0
      %v2191 = vadd.f32 0.0, %v2190
      %v2192 = vpop.f32.mrb[0].mxu0
      %v2193 = vpop.f32.mrb[0].mxu0
      %v2194 = vadd.f32 0.0, %v2193
      %v2195 = vpop.f32.mrb[0].mxu0
      %2196 = vmatprep.mubr.bf16.mxu0 0
      %2197 = vmatmul.mubr.bf16.gmra.mrb[0].mxu0 %v2074
      %v2198 = vpop.f32.mrb[0].mxu0
      %v2199 = vadd.f32 0.0, %v2198
      %v2200 = vpop.f32.mrb[0].mxu0
      %v2201 = vpop.f32.mrb[0].mxu0
      %v2202 = vadd.f32 0.0, %v2201
      %v2203 = vpop.f32.mrb[0].mxu0
      %2204 = vmatprep.mubr.bf16.mxu0 0
      %2205 = vmatmul.mubr.bf16.gmra.mrb[0].mxu0 %v2076
      %v2206 = vpop.f32.mrb[0].mxu0
      %v2207 = vadd.f32 0.0, %v2206
      %v2208 = vpop.f32.mrb[0].mxu0
      %v2209 = vpop.f32.mrb[0].mxu0
      %v2210 = vadd.f32 0.0, %v2209
      %v2211 = vpop.f32.mrb[0].mxu0
      %2212 = vmatprep.mubr.bf16.mxu0 0
      %2213 = vmatmul.mubr.bf16.gmra.mrb[0].mxu0 %v2075
      %v2214 = vpop.f32.mrb[0].mxu0
      %v2215 = vadd.f32 0.0, %v2214
      %v2216 = vpop.f32.mrb[0].mxu0
      %v2217 = vpop.f32.mrb[0].mxu0
      %v2218 = vpop.f32.mrb[0].mxu0
      %2219 = vdwg.mxu0
      %v2220 = vadd.f32 %v2029, %v2167
      %v2221 = vadd.f32 %v2030, %v2170
      %v2222 = vadd.f32 %v2031, %v2175
      %v2223 = vadd.f32 %v2032, %v2178
      %v2224 = vadd.f32 %v2033, %v2183
      %v2225 = vadd.f32 %v2034, %v2186
      %v2226 = vadd.f32 %v2035, %v2191
      %v2227 = vadd.f32 %v2036, %v2194
      %v2228 = vadd.f32 %v2037, %v2199
      %v2229 = vadd.f32 %v2038, %v2202
      %v2230 = vadd.f32 %v2039, %v2207
      %v2231 = vadd.f32 %v2040, %v2210
      %v2232 = vadd.f32 %v2041, %v2215
      %v2233 = vld [vmem:[%s239] sm:$0xf]
      %v2234 = vld [vmem:[%s239 + $0x4] sm:$0xf]
      %v2235 = vld [vmem:[%s239 + $0x8] sm:$0xf]
      %v2236 = vld [vmem:[%s239 + $0xc] sm:$0xf]
      %v2237 = vld [vmem:[%s239 + $0x10] sm:$0xf]
      %v2238 = vld [vmem:[%s239 + $0x14] sm:$0xf]
      %v2239 = vld [vmem:[%s239 + $0x18] sm:$0xf]
      %v2240 = vld [vmem:[%s239 + $0x1c] sm:$0xf]
      %v2241 = vld [vmem:[%s239 + $0x20] sm:$0xf]
      %v2242 = vld [vmem:[%s239 + $0x24] sm:$0xf]
      %v2243 = vld [vmem:[%s239 + $0x28] sm:$0xf]
      %v2244 = vld [vmem:[%s239 + $0x2c] sm:$0xf]
      %v2245 = vld [vmem:[%s239 + $0x30] sm:$0x3]
      %v2246 = vld [vmem:[%s4] sm:$0x3]
      %v2260 = vunpack.c.l.b16 %v2233
      %v2261 = vunpack.c.l.b16 %v2234
      %v2262 = vunpack.c.l.b16 %v2235
      %v2263 = vunpack.c.l.b16 %v2236
      %v2264 = vunpack.c.l.b16 %v2237
      %v2265 = vunpack.c.l.b16 %v2238
      %v2266 = vunpack.c.l.b16 %v2239
      %v2267 = vunpack.c.l.b16 %v2240
      %v2268 = vunpack.c.l.b16 %v2241
      %v2269 = vunpack.c.l.b16 %v2242
      %v2270 = vunpack.c.l.b16 %v2243
      %v2271 = vunpack.c.l.b16 %v2244
      %v2272 = vunpack.c.l.b16 %v2245
      %v2273 = vpack.c.b16 %v2261, %v2260
      %v2274 = vpack.c.b16 %v2263, %v2262
      %v2275 = vpack.c.b16 %v2265, %v2264
      %v2276 = vpack.c.b16 %v2267, %v2266
      %v2277 = vpack.c.b16 %v2269, %v2268
      %v2278 = vpack.c.b16 %v2271, %v2270
      %v2279 = vpack.c.b16 %v2272, %v2272
      %vm2280 = vcmask 31744
      %v2282 = vsel %vm2280, %v2273, 0
      %v2285 = vsel %vm2280, %v2274, 0
      %v2288 = vsel %vm2280, %v2275, 0
      %v2291 = vsel %vm2280, %v2276, 0
      %v2294 = vsel %vm2280, %v2277, 0
      %v2297 = vsel %vm2280, %v2278, 0
      %v2300 = vsel %vm2280, %v2279, 0
      %vm2302 = vcmask 1041408
      %v2304 = vsel %vm2302, %v2246, 0
      %2306 = vmatprep.subr.bf16.mxu0 0
      %2307 = vmatpush1.bf16.msra.mxu0 %v2304
      %2308 = vmatprep.subr.bf16.mxu0 0
      %2309 = vmatpush1.bf16.msra.mxu0 0
      %2310 = vmatprep.subr.bf16.mxu0 0
      %2311 = vmatpush1.bf16.msra.mxu0 0
      %2312 = vmatprep.subr.bf16.mxu0 0
      %2313 = vmatpush1.bf16.msra.mxu0 0
      %2314 = vmatprep.subr.bf16.mxu0 0
      %2315 = vmatpush1.bf16.msra.mxu0 0
      %2316 = vmatprep.subr.bf16.mxu0 0
      %2317 = vmatpush1.bf16.msra.mxu0 0
      %2318 = vmatprep.subr.bf16.mxu0 0
      %2319 = vmatpush1.bf16.msra.mxu0 0
      %2320 = vmatprep.subr.bf16.mxu0 0
      %2321 = vmatpush1.bf16.msra.mxu0 0
      %2322 = vmatprep.subr.bf16.mxu0 0
      %2323 = vmatpush1.bf16.msra.mxu0 0
      %2324 = vmatprep.subr.bf16.mxu0 0
      %2325 = vmatpush1.bf16.msra.mxu0 0
      %2326 = vmatprep.subr.bf16.mxu0 0
      %2327 = vmatpush1.bf16.msra.mxu0 0
      %2328 = vmatprep.subr.bf16.mxu0 0
      %2329 = vmatpush1.bf16.msra.mxu0 0
      %2330 = vmatprep.subr.bf16.mxu0 0
      %2331 = vmatpush1.bf16.msra.mxu0 0
      %2332 = vmatprep.subr.bf16.mxu0 0
      %2333 = vmatpush1.bf16.msra.mxu0 0
      %2334 = vmatprep.subr.bf16.mxu0 0
      %2335 = vmatpush1.bf16.msra.mxu0 0
      %2336 = vmatprep.subr.bf16.mxu0 0
      %2337 = vmatpush1.bf16.msra.mxu0 0
      %2338 = vmatprep.mubr.bf16.mxu0 0
      %2339 = vmatmul.mubr.bf16.gmra.mrb[0].mxu0 %v2282
      %v2340 = vpop.f32.mrb[0].mxu0
      %v2341 = vadd.f32 0.0, %v2340
      %v2342 = vpop.f32.mrb[0].mxu0
      %v2343 = vpop.f32.mrb[0].mxu0
      %v2344 = vadd.f32 0.0, %v2343
      %v2345 = vpop.f32.mrb[0].mxu0
      %2346 = vmatprep.mubr.bf16.mxu0 0
      %2347 = vmatmul.mubr.bf16.gmra.mrb[0].mxu0 %v2285
      %v2348 = vpop.f32.mrb[0].mxu0
      %v2349 = vadd.f32 0.0, %v2348
      %v2350 = vpop.f32.mrb[0].mxu0
      %v2351 = vpop.f32.mrb[0].mxu0
      %v2352 = vadd.f32 0.0, %v2351
      %v2353 = vpop.f32.mrb[0].mxu0
      %2354 = vmatprep.mubr.bf16.mxu0 0
      %2355 = vmatmul.mubr.bf16.gmra.mrb[0].mxu0 %v2288
      %v2356 = vpop.f32.mrb[0].mxu0
      %v2357 = vadd.f32 0.0, %v2356
      %v2358 = vpop.f32.mrb[0].mxu0
      %v2359 = vpop.f32.mrb[0].mxu0
      %v2360 = vadd.f32 0.0, %v2359
      %v2361 = vpop.f32.mrb[0].mxu0
      %2362 = vmatprep.mubr.bf16.mxu0 0
      %2363 = vmatmul.mubr.bf16.gmra.mrb[0].mxu0 %v2291
      %v2364 = vpop.f32.mrb[0].mxu0
      %v2365 = vadd.f32 0.0, %v2364
      %v2366 = vpop.f32.mrb[0].mxu0
      %v2367 = vpop.f32.mrb[0].mxu0
      %v2368 = vadd.f32 0.0, %v2367
      %v2369 = vpop.f32.mrb[0].mxu0
      %2370 = vmatprep.mubr.bf16.mxu0 0
      %2371 = vmatmul.mubr.bf16.gmra.mrb[0].mxu0 %v2294
      %v2372 = vpop.f32.mrb[0].mxu0
      %v2373 = vadd.f32 0.0, %v2372
      %v2374 = vpop.f32.mrb[0].mxu0
      %v2375 = vpop.f32.mrb[0].mxu0
      %v2376 = vadd.f32 0.0, %v2375
      %v2377 = vpop.f32.mrb[0].mxu0
      %2378 = vmatprep.mubr.bf16.mxu0 0
      %2379 = vmatmul.mubr.bf16.gmra.mrb[0].mxu0 %v2297
      %v2380 = vpop.f32.mrb[0].mxu0
      %v2381 = vadd.f32 0.0, %v2380
      %v2382 = vpop.f32.mrb[0].mxu0
      %v2383 = vpop.f32.mrb[0].mxu0
      %v2384 = vadd.f32 0.0, %v2383
      %v2385 = vpop.f32.mrb[0].mxu0
      %2386 = vmatprep.mubr.bf16.mxu0 0
      %2387 = vmatmul.mubr.bf16.gmra.mrb[0].mxu0 %v2300
      %v2388 = vpop.f32.mrb[0].mxu0
      %v2389 = vadd.f32 0.0, %v2388
      %v2390 = vpop.f32.mrb[0].mxu0
      %v2391 = vpop.f32.mrb[0].mxu0
      %v2392 = vpop.f32.mrb[0].mxu0
      %2393 = vdwg.mxu0
      %v2394 = vadd.f32 %v2220, %v2341
      %v2395 = vadd.f32 %v2221, %v2344
      %v2396 = vadd.f32 %v2222, %v2349
      %v2397 = vadd.f32 %v2223, %v2352
      %v2398 = vadd.f32 %v2224, %v2357
      %v2399 = vadd.f32 %v2225, %v2360
      %v2400 = vadd.f32 %v2226, %v2365
      %v2401 = vadd.f32 %v2227, %v2368
      %v2402 = vadd.f32 %v2228, %v2373
      %v2403 = vadd.f32 %v2229, %v2376
      %v2404 = vadd.f32 %v2230, %v2381
      %v2405 = vadd.f32 %v2231, %v2384
      %v2406 = vadd.f32 %v2232, %v2389
      %v2407 = vld [vmem:[%s2] sm:$0x1]
      %v2409 = vlaneseq
      %v2410 = vshrl.u32 %v2409, 7
      %v2411 = vsub.s32 0, %v2410
      %v2412 = vrot.slane %v2407, %v2411
      %v2414 = vadd.f32 %v2394, %v2412
      %v2415 = vadd.f32 %v2395, %v2412
      %v2416 = vadd.f32 %v2396, %v2412
      %v2417 = vadd.f32 %v2397, %v2412
      %v2418 = vadd.f32 %v2398, %v2412
      %v2419 = vadd.f32 %v2399, %v2412
      %v2420 = vadd.f32 %v2400, %v2412
      %v2421 = vadd.f32 %v2401, %v2412
      %v2422 = vadd.f32 %v2402, %v2412
      %v2423 = vadd.f32 %v2403, %v2412
      %v2424 = vadd.f32 %v2404, %v2412
      %v2425 = vadd.f32 %v2405, %v2412
      %v2426 = vadd.f32 %v2406, %v2412
      %v2427 = vmax.f32 %v2414, 0.0
      %v2428 = vmax.f32 %v2415, 0.0
      %v2429 = vmax.f32 %v2416, 0.0
      %v2430 = vmax.f32 %v2417, 0.0
      %v2431 = vmax.f32 %v2418, 0.0
      %v2432 = vmax.f32 %v2419, 0.0
      %v2433 = vmax.f32 %v2420, 0.0
      %v2434 = vmax.f32 %v2421, 0.0
      %v2435 = vmax.f32 %v2422, 0.0
      %v2436 = vmax.f32 %v2423, 0.0
      %v2437 = vmax.f32 %v2424, 0.0
      %v2438 = vmax.f32 %v2425, 0.0
      %v2439 = vmax.f32 %v2426, 0.0
      %2440 = vst [vmem:[%s244] sm:$0xff] %v2427
      %2441 = vst [vmem:[%s244 + $0x8] sm:$0xff] %v2428
      %2442 = vst [vmem:[%s244 + $0x10] sm:$0xff] %v2429
      %2443 = vst [vmem:[%s244 + $0x18] sm:$0xff] %v2430
      %2444 = vst [vmem:[%s244 + $0x20] sm:$0xff] %v2431
      %2445 = vst [vmem:[%s244 + $0x28] sm:$0xff] %v2432
      %2446 = vst [vmem:[%s244 + $0x30] sm:$0xff] %v2433
      %2447 = vst [vmem:[%s244 + $0x38] sm:$0xff] %v2434
      %2448 = vst [vmem:[%s244 + $0x40] sm:$0xff] %v2435
      %2449 = vst [vmem:[%s244 + $0x48] sm:$0xff] %v2436
      %2450 = vst [vmem:[%s244 + $0x50] sm:$0xff] %v2437
      %2451 = vst [vmem:[%s244 + $0x58] sm:$0xff] %v2438
      %2452 = vst [vmem:[%s244 + $0x60] sm:$0xf] %v2439
      %p2453 = scmp.lt.s32.totalorder %s16, 1
      %s2454 = scalar_select %p2453, %s16, 1
      %s2455 = smul.addr %s2454, 13
      %s2456 = smul.addr %s2455, 8
      %s2457 = scalar_lea.vmem %s5, %s2456
      // Predicated region
      $region41: #{basic_block_forward.3} parent=39 // pred_check
        %p2458 = pneg %p149
      $region42: #{basic_block_forward.3} parent=39 // pred_check_branch
        %2460 = sbr.rel (%p2458) target = $region44
      $region43: #{basic_block_forward.3} parent=39 // pred_region
        _
      $region44: #{basic_block_forward.3} parent=39 // pred_fallthru
        _
    $region40: #{basic_block_forward.3} parent=5 // pred_fallthru
      _
    %p2461 = scmp.le.s32.totalorder 2, %s11
    // Predicated region
    $region45: #{basic_block_forward.3} parent=5 // pred_check
      %p2462 = pneg %p2461
    $region46: #{basic_block_forward.3} parent=5 // pred_check_branch
      %2464 = sbr.rel (%p2462) target = $region48
    $region47: #{basic_block_forward.3} parent=5 // pred_region
      %s2465 = ssub.s32 %s11, 2
      // Predicated region
      $region49: #{basic_block_forward.3} parent=47 // pred_check
        %p2466 = pneg %p155
      $region50: #{basic_block_forward.3} parent=47 // pred_check_branch
        %2468 = sbr.rel (%p2466) target = $region52
      $region51: #{basic_block_forward.3} parent=47 // pred_region
        %p2469 = scmp.lt.s32.totalorder %s17, 1
        %s2470 = scalar_select %p2469, %s17, 1
        %s2471 = smul.addr %s2470, 13
        %s2472 = smul.addr %s2471, 8
        %s2473 = scalar_lea.vmem %s5, %s2472
      $region52: #{basic_block_forward.3} parent=47 // pred_fallthru
        _
    $region48: #{basic_block_forward.3} parent=5 // pred_fallthru
      _
  $region6: #{basic_block_forward.3} parent=0 // loop_footer
    %s15 = sadd.s32 1, %s11
  $region7: #{basic_block_forward.3} parent=0 // loop_footer_branch
    %10 = sbr.rel target = $region3
  $region8: #{basic_block_forward.3} parent=0 // loop_exit
    _

</llo_original>
